<compile_context>
chip_gen: v6e
topology: v6e:2x2x1
jax: 0.10.0
libtpu: 0.0.40
codegen_flags: <defaults>
</compile_context>

<pallas_src>
import functools
import math

import jax
import jax.numpy as jnp
import numpy as np
from jax import lax
from jax.experimental import pallas as pl
from jax.experimental.pallas import tpu as pltpu

LEAK = 0.2
BN_EPS = 1e-5
LANE = 128                        # TPU lane width (last-dim granularity)
STAT_ROWS = 8                     # f32 sublane granularity for the stats block
_MIN_TILE_M = 16                  # bf16 sublane granularity
_TILE_M_TARGET = 512              # 256-aligned default tile (v5e/v6e/v7x)
_VMEM_LIMIT = 32 * 1024 * 1024    # explicit scoped-VMEM limit
_VMEM_BUDGET = 20 * 1024 * 1024   # keep working set well under the limit


def _round_up(x, m):
    return ((x + m - 1) // m) * m


def _pad2d(x, rows, cols):
    return jnp.pad(x, ((0, rows - x.shape[0]), (0, cols - x.shape[1])))


def _compiler_params():
    return pltpu.CompilerParams(dimension_semantics=("parallel",),
                                vmem_limit_bytes=_VMEM_LIMIT)


def _plan_m(m, kp, cpad):
    """Pick TILE_M (and padded M) so the double-buffered set fits in VMEM."""
    def vmem_bytes(t):
        # x tile (bf16) + out tile (f32), double-buffered, + resident weight.
        return (2 * (t * kp * 2 + t * cpad * 4)
                + 2 * kp * cpad * 2 + 2 * STAT_ROWS * cpad * 4)
    tile = _TILE_M_TARGET
    while tile > _MIN_TILE_M and vmem_bytes(tile) > _VMEM_BUDGET:
        tile //= 2
    tile = min(tile, _round_up(max(m, 1), _MIN_TILE_M))
    return tile, _round_up(m, tile)


# ----------------------------------------------------------------------------
# Pallas kernels
# ----------------------------------------------------------------------------
def _mm_bias_act_kernel(x_ref, w_ref, b_ref, o_ref, *, act):
    """y = x @ w + b ; LeakyReLU(0.2) or sigmoid.  bf16 operands, f32 epilogue."""
    y = jnp.dot(x_ref[...], w_ref[...], preferred_element_type=jnp.float32)
    y = y + b_ref[...]
    if act == "lrelu":
        o_ref[...] = jnp.where(y > 0, y, LEAK * y)
    else:  # numerically stable sigmoid: exp of non-positive arguments only
        z = jnp.exp(-jnp.abs(y))
        o_ref[...] = jnp.where(y >= 0, 1.0, z) / (1.0 + z)


def _mm_stats_kernel(x_ref, w_ref, y_ref, s_ref):
    """BN pass 1: y = x @ w, plus per-tile partial sum / sum-of-squares."""
    y = jnp.dot(x_ref[...], w_ref[...], preferred_element_type=jnp.float32)
    y_ref[...] = y
    s = jnp.sum(y, axis=0, keepdims=True)           # (1, Cpad)
    ss = jnp.sum(y * y, axis=0, keepdims=True)      # (1, Cpad)
    row = lax.broadcasted_iota(jnp.int32, (1, STAT_ROWS, y.shape[1]), 1)
    s_ref[...] = jnp.where(row == 0, s[None],
                           jnp.where(row == 1, ss[None], 0.0))


def _affine_lrelu_kernel(y_ref, scale_ref, shift_ref, o_ref):
    """BN pass 2: folded batch-norm affine + LeakyReLU(0.2)."""
    y = y_ref[...] * scale_ref[...] + shift_ref[...]
    o_ref[...] = jnp.where(y > 0, y, LEAK * y)


# ----------------------------------------------------------------------------
# JAX-side glue: im2col (NHWC) + per-layer pallas_call wrappers
# ----------------------------------------------------------------------------
def _im2col_nhwc(x, k, s, p):
    """x: (N, H, W, C) -> patches (N*Ho*Wo, k*k*C), taps ordered (ki, kj, c)."""
    # TODO(synk): build patches inside the kernel (k*k small matmuls over the
    # taps) to avoid materializing the k*k-times-larger im2col matrix in HBM.
    N, H, W, C = x.shape
    xp = jnp.pad(x, ((0, 0), (p, p), (p, p), (0, 0)))
    Ho = (H + 2 * p - k) // s + 1
    Wo = (W + 2 * p - k) // s + 1
    cols = []
    for ki in range(k):
        for kj in range(k):
            cols.append(xp[:, ki:ki + s * Ho:s, kj:kj + s * Wo:s, :])
    pat = jnp.stack(cols, axis=3)                   # (N, Ho, Wo, k*k, C)
    return pat.reshape(N * Ho * Wo, k * k * C), Ho, Wo


def _conv_bias_act(x_nhwc, layer, act):
    w, b, cout = layer["w"], layer["b"], layer["cout"]
    kp, cpad = w.shape
    n = x_nhwc.shape[0]
    pat, ho, wo = _im2col_nhwc(x_nhwc, 4, 2, 1)
    m = pat.shape[0]
    tile, m_pad = _plan_m(m, kp, cpad)
    pat = _pad2d(pat, m_pad, kp).astype(jnp.bfloat16)
    out = pl.pallas_call(
        functools.partial(_mm_bias_act_kernel, act=act),
        out_shape=jax.ShapeDtypeStruct((m_pad, cpad), jnp.float32),
        grid_spec=pltpu.PrefetchScalarGridSpec(
            num_scalar_prefetch=0,
            grid=(m_pad // tile,),
            in_specs=[
                pl.BlockSpec((tile, kp), lambda i: (i, 0)),    # activation tile
                pl.BlockSpec((kp, cpad), lambda i: (0, 0)),    # resident weight
                pl.BlockSpec((1, cpad), lambda i: (0, 0)),     # bias
            ],
            out_specs=pl.BlockSpec((tile, cpad), lambda i: (i, 0)),
        ),
        compiler_params=_compiler_params(),
    )(pat, w, b)
    return out[:m, :cout].reshape(n, ho, wo, cout)


def _conv_bn_lrelu(x_nhwc, layer):
    w, gamma, beta, cout = layer["w"], layer["gamma"], layer["beta"], layer["cout"]
    kp, cpad = w.shape
    n = x_nhwc.shape[0]
    pat, ho, wo = _im2col_nhwc(x_nhwc, 4, 2, 1)
    m = pat.shape[0]
    tile, m_pad = _plan_m(m, kp, cpad)
    pat = _pad2d(pat, m_pad, kp).astype(jnp.bfloat16)
    n_tiles = m_pad // tile

    # Pass 1: matmul + per-tile partial BN statistics (parallel over M tiles).
    y, stats = pl.pallas_call(
        _mm_stats_kernel,
        out_shape=(jax.ShapeDtypeStruct((m_pad, cpad), jnp.float32),
                   jax.ShapeDtypeStruct((n_tiles, STAT_ROWS, cpad), jnp.float32)),
        grid_spec=pltpu.PrefetchScalarGridSpec(
            num_scalar_prefetch=0,
            grid=(n_tiles,),
            in_specs=[
                pl.BlockSpec((tile, kp), lambda i: (i, 0)),
                pl.BlockSpec((kp, cpad), lambda i: (0, 0)),
            ],
            out_specs=[
                pl.BlockSpec((tile, cpad), lambda i: (i, 0)),
                pl.BlockSpec((1, STAT_ROWS, cpad), lambda i: (i, 0, 0)),
            ],
        ),
        compiler_params=_compiler_params(),
    )(pat, w)

    # Cross-tile reduction + BN fold (tiny per-channel math; padded rows are
    # exact zeros so they contribute nothing; divide by the TRUE row count m).
    total = jnp.sum(stats, axis=0)                       # (8, Cpad)
    mean = total[0] / m
    var = jnp.maximum(total[1] / m - mean * mean, 0.0)   # biased batch variance
    inv_std = lax.rsqrt(var + BN_EPS)
    scale = (gamma[0] * inv_std)[None, :]                # (1, Cpad)
    shift = (beta[0] - mean * gamma[0] * inv_std)[None, :]

    # Pass 2: folded affine + LeakyReLU (parallel over M tiles).
    out = pl.pallas_call(
        _affine_lrelu_kernel,
        out_shape=jax.ShapeDtypeStruct((m_pad, cpad), jnp.float32),
        grid_spec=pltpu.PrefetchScalarGridSpec(
            num_scalar_prefetch=0,
            grid=(n_tiles,),
            in_specs=[
                pl.BlockSpec((tile, cpad), lambda i: (i, 0)),
                pl.BlockSpec((1, cpad), lambda i: (0, 0)),
                pl.BlockSpec((1, cpad), lambda i: (0, 0)),
            ],
            out_specs=pl.BlockSpec((tile, cpad), lambda i: (i, 0)),
        ),
        compiler_params=_compiler_params(),
    )(y, scale, shift)
    return out[:m, :cout].reshape(n, ho, wo, cout)


# ----------------------------------------------------------------------------
# Parameters: synthetic init (PyTorch layout) + one-time matmul-layout prep
# ----------------------------------------------------------------------------
def init_params(key, num_classes, im_shape, inner_feature):
    im_channel, im_size = im_shape[0], im_shape[-1]
    n_inner = int(math.log2(im_size)) - 2
    assert 2 ** (n_inner + 2) == im_size, "image size must be a power of two"

    keys = jax.random.split(key, 5 + 3 * n_inner)
    kit = iter(keys)
    params = {}
    params["embed"] = 0.1 * jax.random.normal(
        next(kit), (num_classes, int(np.prod(im_shape))), jnp.float32)

    f = inner_feature
    params["w0"] = 0.05 * jax.random.normal(
        next(kit), (f, im_channel + 1, 4, 4), jnp.float32)
    params["b0"] = 0.01 * jax.random.normal(next(kit), (f,), jnp.float32)

    blocks = []
    for i in range(n_inner):
        cin, cout = f * 2 ** i, f * 2 ** (i + 1)
        w = 0.05 * jax.random.normal(next(kit), (cout, cin, 4, 4), jnp.float32)
        gamma = 1.0 + 0.05 * jax.random.normal(next(kit), (cout,), jnp.float32)
        beta = 0.05 * jax.random.normal(next(kit), (cout,), jnp.float32)
        blocks.append((w, gamma, beta))
    params["blocks"] = blocks

    cfin = f * 2 ** n_inner
    params["wf"] = 0.05 * jax.random.normal(next(kit), (1, cfin, 4, 4), jnp.float32)
    params["bf"] = 0.01 * jax.random.normal(next(kit), (1,), jnp.float32)
    return params


def prepare_params(params):
    """One-time conversion of PyTorch-layout weights to padded matmul layout."""
    def wmat(w):                  # (Cout, Cin, kh, kw) -> (Kp, Cpad) bf16
        cout, cin, kh, kw = w.shape
        m = jnp.transpose(w, (2, 3, 1, 0)).reshape(kh * kw * cin, cout)
        kp = _round_up(kh * kw * cin, LANE)
        cp = _round_up(cout, LANE)
        return _pad2d(m, kp, cp).astype(jnp.bfloat16)

    def vec(v, cp):               # (Cout,) -> (1, Cpad) f32 (zero padded)
        return jnp.pad(v, (0, cp - v.shape[0])).astype(jnp.float32)[None, :]

    prep = {"embed": params["embed"]}
    cp0 = _round_up(params["b0"].shape[0], LANE)
    prep["l0"] = {"w": wmat(params["w0"]), "b": vec(params["b0"], cp0),
                  "cout": int(params["b0"].shape[0])}
    blocks = []
    for (w, gamma, beta) in params["blocks"]:
        cp = _round_up(gamma.shape[0], LANE)
        blocks.append({"w": wmat(w), "gamma": vec(gamma, cp),
                       "beta": vec(beta, cp), "cout": int(gamma.shape[0])})
    prep["blocks"] = blocks
    prep["lf"] = {"w": wmat(params["wf"]), "b": vec(params["bf"], LANE), "cout": 1}
    return prep


# ----------------------------------------------------------------------------
# Forward pass (Pallas) and reference (same math, plain XLA, bf16 matmuls)
# ----------------------------------------------------------------------------
def discriminator_forward(prep, im, label, im_shape):
    n = im.shape[0]
    emb = jnp.take(prep["embed"], label, axis=0).reshape(n, *im_shape)
    x = jnp.concatenate([im, emb], axis=1)                        # NCHW
    x = jnp.transpose(x, (0, 2, 3, 1)).astype(jnp.float32)        # NHWC once
    x = _conv_bias_act(x, prep["l0"], act="lrelu")
    for blk in prep["blocks"]:
        x = _conv_bn_lrelu(x, blk)
    x = _conv_bias_act(x, prep["lf"], act="sigmoid")              # (N,1,1,1)
    return jnp.transpose(x, (0, 3, 1, 2))


def _conv_ref(x_nhwc, w):
    cout, cin, kh, kw = w.shape
    pat, ho, wo = _im2col_nhwc(x_nhwc, 4, 2, 1)
    wm = jnp.transpose(w, (2, 3, 1, 0)).reshape(kh * kw * cin, cout)
    y = jnp.dot(pat.astype(jnp.bfloat16), wm.astype(jnp.bfloat16),
                preferred_element_type=jnp.float32)
    return y, ho, wo


def discriminator_forward_ref(params, im, label, im_shape):
    n = im.shape[0]
    emb = jnp.take(params["embed"], label, axis=0).reshape(n, *im_shape)
    x = jnp.concatenate([im, emb], axis=1)
    x = jnp.transpose(x, (0, 2, 3, 1)).astype(jnp.float32)

    y, ho, wo = _conv_ref(x, params["w0"])
    y = y + params["b0"][None, :]
    y = jnp.where(y > 0, y, LEAK * y)
    x = y.reshape(n, ho, wo, -1)

    for (w, gamma, beta) in params["blocks"]:
        y, ho, wo = _conv_ref(x, w)
        mean = jnp.mean(y, axis=0, keepdims=True)
        var = jnp.mean(jnp.square(y - mean), axis=0, keepdims=True)
        y = (y - mean) * lax.rsqrt(var + BN_EPS) * gamma[None, :] + beta[None, :]
        y = jnp.where(y > 0, y, LEAK * y)
        x = y.reshape(n, ho, wo, -1)

    y, ho, wo = _conv_ref(x, params["wf"])
    y = jax.nn.sigmoid(y + params["bf"][None, :])
    return y.reshape(n, ho, wo, 1).transpose(0, 3, 1, 2)


# ----------------------------------------------------------------------------
if __name__ == "__main__":
    # Small shapes consistent with the module: 16x16 single-channel image,
    # inner_feature=8, 4 classes, batch=2  ->  n_inner_block = 2.
    num_classes = 4
    im_shape = (1, 16, 16)
    inner_feature = 8
    batch = 2

    key = jax.random.PRNGKey(0)
    kp_, kim, klab = jax.random.split(key, 3)
    params = init_params(kp_, num_classes, im_shape, inner_feature)
    prep = prepare_params(params)                      # one-time weight prep
    im = jax.random.normal(kim, (batch, *im_shape), jnp.float32)
    label = jax.random.randint(klab, (batch,), 0, num_classes, jnp.int32)

    fwd = jax.jit(lambda im_, lab_: discriminator_forward(prep, im_, lab_, im_shape))
    out = jax.block_until_ready(fwd(im, label))

    ref = discriminator_forward_ref(params, im, label, im_shape)
    assert out.shape == (batch, 1, 1, 1), out.shape
    assert bool(jnp.all(jnp.isfinite(out)))
    assert bool(jnp.all((out > 0.0) & (out < 1.0)))    # sigmoid range
    np.testing.assert_allclose(np.asarray(out), np.asarray(ref),
                               rtol=5e-3, atol=5e-3)
    print("KERNEL_OK")
</pallas_src>

<mosaic_0001>
module attributes {stable_mosaic.version = 11 : i64} {
  func.func @_mm_bias_act_kernel(%arg0: i32, %arg1: memref<128x128xbf16, #tpu.memory_space<vmem>>, %arg2: memref<128x128xbf16, #tpu.memory_space<vmem>>, %arg3: memref<1x128xf32, #tpu.memory_space<vmem>>, %arg4: memref<128x128xf32, #tpu.memory_space<vmem>>) attributes {dimension_semantics = [#tpu.dimension_semantics<parallel>], iteration_bounds = array<i64: 1>, scalar_prefetch = 0 : i64, scratch_operands = 0 : i64, tpu.core_type = #tpu.core_type<tc>, window_params = [{transform_indices = @transform_0, window_bounds = array<i64: 128, 128>}, {pipeline_mode = #tpu.pipeline_mode<synchronous>, transform_indices = @transform_1, window_bounds = array<i64: 128, 128>}, {pipeline_mode = #tpu.pipeline_mode<synchronous>, transform_indices = @transform_2, window_bounds = array<i64: 1, 128>}, {transform_indices = @transform_3, window_bounds = array<i64: 128, 128>}]} {
    %c0 = arith.constant 0 : index
    %c0_0 = arith.constant 0 : index
    %0 = vector.load %arg1[%c0, %c0_0] : memref<128x128xbf16, #tpu.memory_space<vmem>>, vector<128x128xbf16>
    %c0_1 = arith.constant 0 : index
    %c0_2 = arith.constant 0 : index
    %1 = vector.load %arg2[%c0_1, %c0_2] : memref<128x128xbf16, #tpu.memory_space<vmem>>, vector<128x128xbf16>
    %cst = arith.constant dense<0.000000e+00> : vector<128x128xf32>
    %2 = tpu.matmul %0, %1, %cst {dimension_numbers = #tpu.dot_dimension_numbers<[1], [0], [0], [1], [0, 0, 1, 1], [], []>} : vector<128x128xbf16>, vector<128x128xbf16>, vector<128x128xf32> -> vector<128x128xf32>
    %c0_3 = arith.constant 0 : index
    %c0_4 = arith.constant 0 : index
    %3 = vector.load %arg3[%c0_3, %c0_4] : memref<1x128xf32, #tpu.memory_space<vmem>>, vector<1x128xf32>
    %4 = vector.broadcast %3 : vector<1x128xf32> to vector<128x128xf32>
    %5 = arith.addf %2, %4 : vector<128x128xf32>
    %cst_5 = arith.constant 0.000000e+00 : f32
    %6 = vector.broadcast %cst_5 : f32 to vector<128x128xf32>
    %7 = arith.cmpf ogt, %5, %6 : vector<128x128xf32>
    %cst_6 = arith.constant 2.000000e-01 : f32
    %8 = vector.broadcast %cst_6 : f32 to vector<128x128xf32>
    %9 = arith.mulf %8, %5 : vector<128x128xf32>
    %10 = arith.select %7, %5, %9 : vector<128x128xi1>, vector<128x128xf32>
    %c0_7 = arith.constant 0 : index
    %c0_8 = arith.constant 0 : index
    %11 = vector.load %arg4[%c0_7, %c0_8] : memref<128x128xf32, #tpu.memory_space<vmem>>, vector<128x128xf32>
    tpu.vector_store %arg4[%c0_7, %c0_8], %10 {strides = array<i32>} : memref<128x128xf32, #tpu.memory_space<vmem>>, vector<128x128xf32>,
    return
  }
  func.func @transform_0(%arg0: i32) -> (i32, i32) {
    %c0_i32 = arith.constant 0 : i32
    %c0_i32_0 = arith.constant 0 : i32
    return %arg0, %c0_i32 : i32, i32
  }
  func.func @transform_1(%arg0: i32) -> (i32, i32) {
    %c0_i32 = arith.constant 0 : i32
    %c0_i32_0 = arith.constant 0 : i32
    %c0_i32_1 = arith.constant 0 : i32
    return %c0_i32, %c0_i32_0 : i32, i32
  }
  func.func @transform_2(%arg0: i32) -> (i32, i32) {
    %c0_i32 = arith.constant 0 : i32
    %c0_i32_0 = arith.constant 0 : i32
    %c0_i32_1 = arith.constant 0 : i32
    return %c0_i32, %c0_i32_0 : i32, i32
  }
  func.func @transform_3(%arg0: i32) -> (i32, i32) {
    %c0_i32 = arith.constant 0 : i32
    %c0_i32_0 = arith.constant 0 : i32
    return %arg0, %c0_i32 : i32, i32
  }
}

module attributes {stable_mosaic.version = 11 : i64} {
  func.func @_mm_stats_kernel(%arg0: i32, %arg1: memref<32x128xbf16, #tpu.memory_space<vmem>>, %arg2: memref<128x128xbf16, #tpu.memory_space<vmem>>, %arg3: memref<32x128xf32, #tpu.memory_space<vmem>>, %arg4: memref<1x8x128xf32, #tpu.memory_space<vmem>>) attributes {dimension_semantics = [#tpu.dimension_semantics<parallel>], iteration_bounds = array<i64: 1>, scalar_prefetch = 0 : i64, scratch_operands = 0 : i64, tpu.core_type = #tpu.core_type<tc>, window_params = [{transform_indices = @transform_0, window_bounds = array<i64: 32, 128>}, {pipeline_mode = #tpu.pipeline_mode<synchronous>, transform_indices = @transform_1, window_bounds = array<i64: 128, 128>}, {transform_indices = @transform_2, window_bounds = array<i64: 32, 128>}, {transform_indices = @transform_3, window_bounds = array<i64: 1, 8, 128>}]} {
    %c0 = arith.constant 0 : index
    %c0_0 = arith.constant 0 : index
    %0 = vector.load %arg1[%c0, %c0_0] : memref<32x128xbf16, #tpu.memory_space<vmem>>, vector<32x128xbf16>
    %c0_1 = arith.constant 0 : index
    %c0_2 = arith.constant 0 : index
    %1 = vector.load %arg2[%c0_1, %c0_2] : memref<128x128xbf16, #tpu.memory_space<vmem>>, vector<128x128xbf16>
    %cst = arith.constant dense<0.000000e+00> : vector<32x128xf32>
    %2 = tpu.matmul %0, %1, %cst {dimension_numbers = #tpu.dot_dimension_numbers<[1], [0], [0], [1], [0, 0, 1, 1], [], []>} : vector<32x128xbf16>, vector<128x128xbf16>, vector<32x128xf32> -> vector<32x128xf32>
    %c0_3 = arith.constant 0 : index
    %c0_4 = arith.constant 0 : index
    %3 = vector.load %arg3[%c0_3, %c0_4] : memref<32x128xf32, #tpu.memory_space<vmem>>, vector<32x128xf32>
    tpu.vector_store %arg3[%c0_3, %c0_4], %2 {strides = array<i32>} : memref<32x128xf32, #tpu.memory_space<vmem>>, vector<32x128xf32>,
    %cst_5 = arith.constant dense<0.000000e+00> : vector<128xf32>
    %4 = vector.multi_reduction <add>, %2, %cst_5 [0] : vector<32x128xf32> to vector<128xf32>
    %5 = vector.shape_cast %4 : vector<128xf32> to vector<1x128xf32>
    %6 = arith.mulf %2, %2 : vector<32x128xf32>
    %cst_6 = arith.constant dense<0.000000e+00> : vector<128xf32>
    %7 = vector.multi_reduction <add>, %6, %cst_6 [0] : vector<32x128xf32> to vector<128xf32>
    %8 = vector.shape_cast %7 : vector<128xf32> to vector<1x128xf32>
    %9 = tpu.iota {dimensions = array<i32: 1>} : vector<1x8x128xi32>
    %c0_i32 = arith.constant 0 : i32
    %10 = vector.broadcast %c0_i32 : i32 to vector<1x8x128xi32>
    %11 = arith.cmpi eq, %9, %10 : vector<1x8x128xi32>
    %12 = vector.shape_cast %5 : vector<1x128xf32> to vector<1x1x128xf32>
    %c1_i32 = arith.constant 1 : i32
    %13 = vector.broadcast %c1_i32 : i32 to vector<1x8x128xi32>
    %14 = arith.cmpi eq, %9, %13 : vector<1x8x128xi32>
    %15 = vector.shape_cast %8 : vector<1x128xf32> to vector<1x1x128xf32>
    %cst_7 = arith.constant 0.000000e+00 : f32
    %16 = vector.shape_cast %15 : vector<1x1x128xf32> to vector<1x1x128xf32>
    %17 = vector.broadcast %16 : vector<1x1x128xf32> to vector<1x8x128xf32>
    %18 = vector.broadcast %cst_7 : f32 to vector<1x8x128xf32>
    %19 = arith.select %14, %17, %18 : vector<1x8x128xi1>, vector<1x8x128xf32>
    %20 = vector.shape_cast %12 : vector<1x1x128xf32> to vector<1x1x128xf32>
    %21 = vector.broadcast %20 : vector<1x1x128xf32> to vector<1x8x128xf32>
    %22 = arith.select %11, %21, %19 : vector<1x8x128xi1>, vector<1x8x128xf32>
    %c0_8 = arith.constant 0 : index
    %c0_9 = arith.constant 0 : index
    %c0_10 = arith.constant 0 : index
    %23 = vector.load %arg4[%c0_8, %c0_9, %c0_10] : memref<1x8x128xf32, #tpu.memory_space<vmem>>, vector<1x8x128xf32>
    tpu.vector_store %arg4[%c0_8, %c0_9, %c0_10], %22 {strides = array<i32>} : memref<1x8x128xf32, #tpu.memory_space<vmem>>, vector<1x8x128xf32>,
    return
  }
  func.func @transform_0(%arg0: i32) -> (i32, i32) {
    %c0_i32 = arith.constant 0 : i32
    %c0_i32_0 = arith.constant 0 : i32
    return %arg0, %c0_i32 : i32, i32
  }
  func.func @transform_1(%arg0: i32) -> (i32, i32) {
    %c0_i32 = arith.constant 0 : i32
    %c0_i32_0 = arith.constant 0 : i32
    %c0_i32_1 = arith.constant 0 : i32
    return %c0_i32, %c0_i32_0 : i32, i32
  }
  func.func @transform_2(%arg0: i32) -> (i32, i32) {
    %c0_i32 = arith.constant 0 : i32
    %c0_i32_0 = arith.constant 0 : i32
    return %arg0, %c0_i32 : i32, i32
  }
  func.func @transform_3(%arg0: i32) -> (i32, i32, i32) {
    %c0_i32 = arith.constant 0 : i32
    %c0_i32_0 = arith.constant 0 : i32
    %c0_i32_1 = arith.constant 0 : i32
    return %arg0, %c0_i32, %c0_i32_0 : i32, i32, i32
  }
}

module attributes {stable_mosaic.version = 11 : i64} {
  func.func @_affine_lrelu_kernel(%arg0: i32, %arg1: memref<32x128xf32, #tpu.memory_space<vmem>>, %arg2: memref<1x128xf32, #tpu.memory_space<vmem>>, %arg3: memref<1x128xf32, #tpu.memory_space<vmem>>, %arg4: memref<32x128xf32, #tpu.memory_space<vmem>>) attributes {dimension_semantics = [#tpu.dimension_semantics<parallel>], iteration_bounds = array<i64: 1>, scalar_prefetch = 0 : i64, scratch_operands = 0 : i64, tpu.core_type = #tpu.core_type<tc>, window_params = [{transform_indices = @transform_0, window_bounds = array<i64: 32, 128>}, {pipeline_mode = #tpu.pipeline_mode<synchronous>, transform_indices = @transform_1, window_bounds = array<i64: 1, 128>}, {pipeline_mode = #tpu.pipeline_mode<synchronous>, transform_indices = @transform_2, window_bounds = array<i64: 1, 128>}, {transform_indices = @transform_3, window_bounds = array<i64: 32, 128>}]} {
    %c0 = arith.constant 0 : index
    %c0_0 = arith.constant 0 : index
    %0 = vector.load %arg1[%c0, %c0_0] : memref<32x128xf32, #tpu.memory_space<vmem>>, vector<32x128xf32>
    %c0_1 = arith.constant 0 : index
    %c0_2 = arith.constant 0 : index
    %1 = vector.load %arg2[%c0_1, %c0_2] : memref<1x128xf32, #tpu.memory_space<vmem>>, vector<1x128xf32>
    %2 = vector.broadcast %1 : vector<1x128xf32> to vector<32x128xf32>
    %3 = arith.mulf %0, %2 : vector<32x128xf32>
    %c0_3 = arith.constant 0 : index
    %c0_4 = arith.constant 0 : index
    %4 = vector.load %arg3[%c0_3, %c0_4] : memref<1x128xf32, #tpu.memory_space<vmem>>, vector<1x128xf32>
    %5 = vector.broadcast %4 : vector<1x128xf32> to vector<32x128xf32>
    %6 = arith.addf %3, %5 : vector<32x128xf32>
    %cst = arith.constant 0.000000e+00 : f32
    %7 = vector.broadcast %cst : f32 to vector<32x128xf32>
    %8 = arith.cmpf ogt, %6, %7 : vector<32x128xf32>
    %cst_5 = arith.constant 2.000000e-01 : f32
    %9 = vector.broadcast %cst_5 : f32 to vector<32x128xf32>
    %10 = arith.mulf %9, %6 : vector<32x128xf32>
    %11 = arith.select %8, %6, %10 : vector<32x128xi1>, vector<32x128xf32>
    %c0_6 = arith.constant 0 : index
    %c0_7 = arith.constant 0 : index
    %12 = vector.load %arg4[%c0_6, %c0_7] : memref<32x128xf32, #tpu.memory_space<vmem>>, vector<32x128xf32>
    tpu.vector_store %arg4[%c0_6, %c0_7], %11 {strides = array<i32>} : memref<32x128xf32, #tpu.memory_space<vmem>>, vector<32x128xf32>,
    return
  }
  func.func @transform_0(%arg0: i32) -> (i32, i32) {
    %c0_i32 = arith.constant 0 : i32
    %c0_i32_0 = arith.constant 0 : i32
    return %arg0, %c0_i32 : i32, i32
  }
  func.func @transform_1(%arg0: i32) -> (i32, i32) {
    %c0_i32 = arith.constant 0 : i32
    %c0_i32_0 = arith.constant 0 : i32
    %c0_i32_1 = arith.constant 0 : i32
    return %c0_i32, %c0_i32_0 : i32, i32
  }
  func.func @transform_2(%arg0: i32) -> (i32, i32) {
    %c0_i32 = arith.constant 0 : i32
    %c0_i32_0 = arith.constant 0 : i32
    %c0_i32_1 = arith.constant 0 : i32
    return %c0_i32, %c0_i32_0 : i32, i32
  }
  func.func @transform_3(%arg0: i32) -> (i32, i32) {
    %c0_i32 = arith.constant 0 : i32
    %c0_i32_0 = arith.constant 0 : i32
    return %arg0, %c0_i32 : i32, i32
  }
}

module attributes {stable_mosaic.version = 11 : i64} {
  func.func @_affine_lrelu_kernel(%arg0: i32, %arg1: memref<16x128xf32, #tpu.memory_space<vmem>>, %arg2: memref<1x128xf32, #tpu.memory_space<vmem>>, %arg3: memref<1x128xf32, #tpu.memory_space<vmem>>, %arg4: memref<16x128xf32, #tpu.memory_space<vmem>>) attributes {dimension_semantics = [#tpu.dimension_semantics<parallel>], iteration_bounds = array<i64: 1>, scalar_prefetch = 0 : i64, scratch_operands = 0 : i64, tpu.core_type = #tpu.core_type<tc>, window_params = [{transform_indices = @transform_0, window_bounds = array<i64: 16, 128>}, {pipeline_mode = #tpu.pipeline_mode<synchronous>, transform_indices = @transform_1, window_bounds = array<i64: 1, 128>}, {pipeline_mode = #tpu.pipeline_mode<synchronous>, transform_indices = @transform_2, window_bounds = array<i64: 1, 128>}, {transform_indices = @transform_3, window_bounds = array<i64: 16, 128>}]} {
    %c0 = arith.constant 0 : index
    %c0_0 = arith.constant 0 : index
    %0 = vector.load %arg1[%c0, %c0_0] : memref<16x128xf32, #tpu.memory_space<vmem>>, vector<16x128xf32>
    %c0_1 = arith.constant 0 : index
    %c0_2 = arith.constant 0 : index
    %1 = vector.load %arg2[%c0_1, %c0_2] : memref<1x128xf32, #tpu.memory_space<vmem>>, vector<1x128xf32>
    %2 = vector.broadcast %1 : vector<1x128xf32> to vector<16x128xf32>
    %3 = arith.mulf %0, %2 : vector<16x128xf32>
    %c0_3 = arith.constant 0 : index
    %c0_4 = arith.constant 0 : index
    %4 = vector.load %arg3[%c0_3, %c0_4] : memref<1x128xf32, #tpu.memory_space<vmem>>, vector<1x128xf32>
    %5 = vector.broadcast %4 : vector<1x128xf32> to vector<16x128xf32>
    %6 = arith.addf %3, %5 : vector<16x128xf32>
    %cst = arith.constant 0.000000e+00 : f32
    %7 = vector.broadcast %cst : f32 to vector<16x128xf32>
    %8 = arith.cmpf ogt, %6, %7 : vector<16x128xf32>
    %cst_5 = arith.constant 2.000000e-01 : f32
    %9 = vector.broadcast %cst_5 : f32 to vector<16x128xf32>
    %10 = arith.mulf %9, %6 : vector<16x128xf32>
    %11 = arith.select %8, %6, %10 : vector<16x128xi1>, vector<16x128xf32>
    %c0_6 = arith.constant 0 : index
    %c0_7 = arith.constant 0 : index
    %12 = vector.load %arg4[%c0_6, %c0_7] : memref<16x128xf32, #tpu.memory_space<vmem>>, vector<16x128xf32>
    tpu.vector_store %arg4[%c0_6, %c0_7], %11 {strides = array<i32>} : memref<16x128xf32, #tpu.memory_space<vmem>>, vector<16x128xf32>,
    return
  }
  func.func @transform_0(%arg0: i32) -> (i32, i32) {
    %c0_i32 = arith.constant 0 : i32
    %c0_i32_0 = arith.constant 0 : i32
    return %arg0, %c0_i32 : i32, i32
  }
  func.func @transform_1(%arg0: i32) -> (i32, i32) {
    %c0_i32 = arith.constant 0 : i32
    %c0_i32_0 = arith.constant 0 : i32
    %c0_i32_1 = arith.constant 0 : i32
    return %c0_i32, %c0_i32_0 : i32, i32
  }
  func.func @transform_2(%arg0: i32) -> (i32, i32) {
    %c0_i32 = arith.constant 0 : i32
    %c0_i32_0 = arith.constant 0 : i32
    %c0_i32_1 = arith.constant 0 : i32
    return %c0_i32, %c0_i32_0 : i32, i32
  }
  func.func @transform_3(%arg0: i32) -> (i32, i32) {
    %c0_i32 = arith.constant 0 : i32
    %c0_i32_0 = arith.constant 0 : i32
    return %arg0, %c0_i32 : i32, i32
  }
}

module attributes {stable_mosaic.version = 11 : i64} {
  func.func @_mm_stats_kernel(%arg0: i32, %arg1: memref<16x256xbf16, #tpu.memory_space<vmem>>, %arg2: memref<256x128xbf16, #tpu.memory_space<vmem>>, %arg3: memref<16x128xf32, #tpu.memory_space<vmem>>, %arg4: memref<1x8x128xf32, #tpu.memory_space<vmem>>) attributes {dimension_semantics = [#tpu.dimension_semantics<parallel>], iteration_bounds = array<i64: 1>, scalar_prefetch = 0 : i64, scratch_operands = 0 : i64, tpu.core_type = #tpu.core_type<tc>, window_params = [{transform_indices = @transform_0, window_bounds = array<i64: 16, 256>}, {pipeline_mode = #tpu.pipeline_mode<synchronous>, transform_indices = @transform_1, window_bounds = array<i64: 256, 128>}, {transform_indices = @transform_2, window_bounds = array<i64: 16, 128>}, {transform_indices = @transform_3, window_bounds = array<i64: 1, 8, 128>}]} {
    %c0 = arith.constant 0 : index
    %c0_0 = arith.constant 0 : index
    %0 = vector.load %arg1[%c0, %c0_0] : memref<16x256xbf16, #tpu.memory_space<vmem>>, vector<16x256xbf16>
    %c0_1 = arith.constant 0 : index
    %c0_2 = arith.constant 0 : index
    %1 = vector.load %arg2[%c0_1, %c0_2] : memref<256x128xbf16, #tpu.memory_space<vmem>>, vector<256x128xbf16>
    %cst = arith.constant dense<0.000000e+00> : vector<16x128xf32>
    %2 = tpu.matmul %0, %1, %cst {dimension_numbers = #tpu.dot_dimension_numbers<[1], [0], [0], [1], [0, 0, 1, 1], [], []>} : vector<16x256xbf16>, vector<256x128xbf16>, vector<16x128xf32> -> vector<16x128xf32>
    %c0_3 = arith.constant 0 : index
    %c0_4 = arith.constant 0 : index
    %3 = vector.load %arg3[%c0_3, %c0_4] : memref<16x128xf32, #tpu.memory_space<vmem>>, vector<16x128xf32>
    tpu.vector_store %arg3[%c0_3, %c0_4], %2 {strides = array<i32>} : memref<16x128xf32, #tpu.memory_space<vmem>>, vector<16x128xf32>,
    %cst_5 = arith.constant dense<0.000000e+00> : vector<128xf32>
    %4 = vector.multi_reduction <add>, %2, %cst_5 [0] : vector<16x128xf32> to vector<128xf32>
    %5 = vector.shape_cast %4 : vector<128xf32> to vector<1x128xf32>
    %6 = arith.mulf %2, %2 : vector<16x128xf32>
    %cst_6 = arith.constant dense<0.000000e+00> : vector<128xf32>
    %7 = vector.multi_reduction <add>, %6, %cst_6 [0] : vector<16x128xf32> to vector<128xf32>
    %8 = vector.shape_cast %7 : vector<128xf32> to vector<1x128xf32>
    %9 = tpu.iota {dimensions = array<i32: 1>} : vector<1x8x128xi32>
    %c0_i32 = arith.constant 0 : i32
    %10 = vector.broadcast %c0_i32 : i32 to vector<1x8x128xi32>
    %11 = arith.cmpi eq, %9, %10 : vector<1x8x128xi32>
    %12 = vector.shape_cast %5 : vector<1x128xf32> to vector<1x1x128xf32>
    %c1_i32 = arith.constant 1 : i32
    %13 = vector.broadcast %c1_i32 : i32 to vector<1x8x128xi32>
    %14 = arith.cmpi eq, %9, %13 : vector<1x8x128xi32>
    %15 = vector.shape_cast %8 : vector<1x128xf32> to vector<1x1x128xf32>
    %cst_7 = arith.constant 0.000000e+00 : f32
    %16 = vector.shape_cast %15 : vector<1x1x128xf32> to vector<1x1x128xf32>
    %17 = vector.broadcast %16 : vector<1x1x128xf32> to vector<1x8x128xf32>
    %18 = vector.broadcast %cst_7 : f32 to vector<1x8x128xf32>
    %19 = arith.select %14, %17, %18 : vector<1x8x128xi1>, vector<1x8x128xf32>
    %20 = vector.shape_cast %12 : vector<1x1x128xf32> to vector<1x1x128xf32>
    %21 = vector.broadcast %20 : vector<1x1x128xf32> to vector<1x8x128xf32>
    %22 = arith.select %11, %21, %19 : vector<1x8x128xi1>, vector<1x8x128xf32>
    %c0_8 = arith.constant 0 : index
    %c0_9 = arith.constant 0 : index
    %c0_10 = arith.constant 0 : index
    %23 = vector.load %arg4[%c0_8, %c0_9, %c0_10] : memref<1x8x128xf32, #tpu.memory_space<vmem>>, vector<1x8x128xf32>
    tpu.vector_store %arg4[%c0_8, %c0_9, %c0_10], %22 {strides = array<i32>} : memref<1x8x128xf32, #tpu.memory_space<vmem>>, vector<1x8x128xf32>,
    return
  }
  func.func @transform_0(%arg0: i32) -> (i32, i32) {
    %c0_i32 = arith.constant 0 : i32
    %c0_i32_0 = arith.constant 0 : i32
    return %arg0, %c0_i32 : i32, i32
  }
  func.func @transform_1(%arg0: i32) -> (i32, i32) {
    %c0_i32 = arith.constant 0 : i32
    %c0_i32_0 = arith.constant 0 : i32
    %c0_i32_1 = arith.constant 0 : i32
    return %c0_i32, %c0_i32_0 : i32, i32
  }
  func.func @transform_2(%arg0: i32) -> (i32, i32) {
    %c0_i32 = arith.constant 0 : i32
    %c0_i32_0 = arith.constant 0 : i32
    return %arg0, %c0_i32 : i32, i32
  }
  func.func @transform_3(%arg0: i32) -> (i32, i32, i32) {
    %c0_i32 = arith.constant 0 : i32
    %c0_i32_0 = arith.constant 0 : i32
    %c0_i32_1 = arith.constant 0 : i32
    return %arg0, %c0_i32, %c0_i32_0 : i32, i32, i32
  }
}

module attributes {stable_mosaic.version = 11 : i64} {
  func.func @_mm_bias_act_kernel(%arg0: i32, %arg1: memref<16x512xbf16, #tpu.memory_space<vmem>>, %arg2: memref<512x128xbf16, #tpu.memory_space<vmem>>, %arg3: memref<1x128xf32, #tpu.memory_space<vmem>>, %arg4: memref<16x128xf32, #tpu.memory_space<vmem>>) attributes {dimension_semantics = [#tpu.dimension_semantics<parallel>], iteration_bounds = array<i64: 1>, scalar_prefetch = 0 : i64, scratch_operands = 0 : i64, tpu.core_type = #tpu.core_type<tc>, window_params = [{transform_indices = @transform_0, window_bounds = array<i64: 16, 512>}, {pipeline_mode = #tpu.pipeline_mode<synchronous>, transform_indices = @transform_1, window_bounds = array<i64: 512, 128>}, {pipeline_mode = #tpu.pipeline_mode<synchronous>, transform_indices = @transform_2, window_bounds = array<i64: 1, 128>}, {transform_indices = @transform_3, window_bounds = array<i64: 16, 128>}]} {
    %c0 = arith.constant 0 : index
    %c0_0 = arith.constant 0 : index
    %0 = vector.load %arg1[%c0, %c0_0] : memref<16x512xbf16, #tpu.memory_space<vmem>>, vector<16x512xbf16>
    %c0_1 = arith.constant 0 : index
    %c0_2 = arith.constant 0 : index
    %1 = vector.load %arg2[%c0_1, %c0_2] : memref<512x128xbf16, #tpu.memory_space<vmem>>, vector<512x128xbf16>
    %cst = arith.constant dense<0.000000e+00> : vector<16x128xf32>
    %2 = tpu.matmul %0, %1, %cst {dimension_numbers = #tpu.dot_dimension_numbers<[1], [0], [0], [1], [0, 0, 1, 1], [], []>} : vector<16x512xbf16>, vector<512x128xbf16>, vector<16x128xf32> -> vector<16x128xf32>
    %c0_3 = arith.constant 0 : index
    %c0_4 = arith.constant 0 : index
    %3 = vector.load %arg3[%c0_3, %c0_4] : memref<1x128xf32, #tpu.memory_space<vmem>>, vector<1x128xf32>
    %4 = vector.broadcast %3 : vector<1x128xf32> to vector<16x128xf32>
    %5 = arith.addf %2, %4 : vector<16x128xf32>
    %6 = math.absf %5 : vector<16x128xf32>
    %cst_5 = arith.constant 0.000000e+00 : f32
    %7 = vector.broadcast %cst_5 : f32 to vector<16x128xf32>
    %8 = arith.subf %7, %6 : vector<16x128xf32>
    %9 = math.exp %8 : vector<16x128xf32>
    %cst_6 = arith.constant 0.000000e+00 : f32
    %10 = vector.broadcast %cst_6 : f32 to vector<16x128xf32>
    %11 = arith.cmpf oge, %5, %10 : vector<16x128xf32>
    %cst_7 = arith.constant 1.000000e+00 : f32
    %12 = vector.broadcast %cst_7 : f32 to vector<16x128xf32>
    %13 = arith.select %11, %12, %9 : vector<16x128xi1>, vector<16x128xf32>
    %cst_8 = arith.constant 1.000000e+00 : f32
    %14 = vector.broadcast %cst_8 : f32 to vector<16x128xf32>
    %15 = arith.addf %14, %9 : vector<16x128xf32>
    %16 = arith.divf %13, %15 : vector<16x128xf32>
    %c0_9 = arith.constant 0 : index
    %c0_10 = arith.constant 0 : index
    %17 = vector.load %arg4[%c0_9, %c0_10] : memref<16x128xf32, #tpu.memory_space<vmem>>, vector<16x128xf32>
    tpu.vector_store %arg4[%c0_9, %c0_10], %16 {strides = array<i32>} : memref<16x128xf32, #tpu.memory_space<vmem>>, vector<16x128xf32>,
    return
  }
  func.func @transform_0(%arg0: i32) -> (i32, i32) {
    %c0_i32 = arith.constant 0 : i32
    %c0_i32_0 = arith.constant 0 : i32
    return %arg0, %c0_i32 : i32, i32
  }
  func.func @transform_1(%arg0: i32) -> (i32, i32) {
    %c0_i32 = arith.constant 0 : i32
    %c0_i32_0 = arith.constant 0 : i32
    %c0_i32_1 = arith.constant 0 : i32
    return %c0_i32, %c0_i32_0 : i32, i32
  }
  func.func @transform_2(%arg0: i32) -> (i32, i32) {
    %c0_i32 = arith.constant 0 : i32
    %c0_i32_0 = arith.constant 0 : i32
    %c0_i32_1 = arith.constant 0 : i32
    return %c0_i32, %c0_i32_0 : i32, i32
  }
  func.func @transform_3(%arg0: i32) -> (i32, i32) {
    %c0_i32 = arith.constant 0 : i32
    %c0_i32_0 = arith.constant 0 : i32
    return %arg0, %c0_i32 : i32, i32
  }
}

</mosaic_0001>

<llo_original>
// kernel: _lambda_.6
$region0: #{_lambda_.6}
  #allocation0 [shape = 'u32[]', space=smem, size = 0x4, offset = 0x4, fixed_abs, tag = 'smem constant byte address 0x4 - core index']
  #allocation1 [shape = 'u32[144,128]{1,0:T(1,128)}', space=vmem, size = 0x12000, scoped, tag = 'internal scratch']
  %s0 = inlined_call_operand.vmem [shape: bf16[128,128], index: 0, kind: input, shape index: {}]
  %s1 = inlined_call_operand.vmem [shape: bf16[128,128], index: 1, kind: input, shape index: {}]
  %s2 = inlined_call_operand.vmem [shape: f32[1,128], index: 2, kind: input, shape index: {}]
  %s3 = inlined_call_operand.vmem [shape: f32[128,128], index: 3, kind: output, shape index: {}]
  %s4 = sld [smem:[#allocation0]]
  $region22: #{_lambda_.6} parent=0
    _
  %s6 = ssub.s32 1, %s4
  %s7 = scalar_select 0, %s6, %s4
  // Predicated region
  $region2: #{_lambda_.6} parent=0 // pred_check
    _
  $region3: #{_lambda_.6} parent=0 // pred_check_branch
    %9 = sbr.rel (0) target = $region5
  $region4: #{_lambda_.6} parent=0 // pred_region
    _
  $region5: #{_lambda_.6} parent=0 // pred_fallthru
    _
  // Predicated region
  $region6: #{_lambda_.6} parent=0 // pred_check
    _
  $region7: #{_lambda_.6} parent=0 // pred_check_branch
    %11 = sbr.rel (0) target = $region9
  $region8: #{_lambda_.6} parent=0 // pred_region
    _
  $region9: #{_lambda_.6} parent=0 // pred_fallthru
    _
  // Predicated region
  $region10: #{_lambda_.6} parent=0 // pred_check
    _
  $region11: #{_lambda_.6} parent=0 // pred_check_branch
    %13 = sbr.rel (0) target = $region13
  $region12: #{_lambda_.6} parent=0 // pred_region
    _
  $region13: #{_lambda_.6} parent=0 // pred_fallthru
    _
  %v15 = vld [vmem:[%s0] sm:$0xf]
  %v16 = vld [vmem:[%s0 + $0x4] sm:$0xf]
  %v17 = vld [vmem:[%s0 + $0x8] sm:$0xf]
  %v18 = vld [vmem:[%s0 + $0xc] sm:$0xf]
  %v19 = vld [vmem:[%s0 + $0x10] sm:$0xf]
  %v20 = vld [vmem:[%s0 + $0x14] sm:$0xf]
  %v21 = vld [vmem:[%s0 + $0x18] sm:$0xf]
  %v22 = vld [vmem:[%s0 + $0x1c] sm:$0xf]
  %v23 = vld [vmem:[%s0 + $0x20] sm:$0xf]
  %v24 = vld [vmem:[%s0 + $0x24] sm:$0xf]
  %v25 = vld [vmem:[%s0 + $0x28] sm:$0xf]
  %v26 = vld [vmem:[%s0 + $0x2c] sm:$0xf]
  %v27 = vld [vmem:[%s0 + $0x30] sm:$0xf]
  %v28 = vld [vmem:[%s0 + $0x34] sm:$0xf]
  %v29 = vld [vmem:[%s0 + $0x38] sm:$0xf]
  %v30 = vld [vmem:[%s0 + $0x3c] sm:$0xf]
  %v31 = vld [vmem:[%s1] sm:$0xf]
  %v32 = vld [vmem:[%s1 + $0x4] sm:$0xf]
  %v33 = vld [vmem:[%s1 + $0x8] sm:$0xf]
  %v34 = vld [vmem:[%s1 + $0xc] sm:$0xf]
  %v35 = vld [vmem:[%s1 + $0x10] sm:$0xf]
  %v36 = vld [vmem:[%s1 + $0x14] sm:$0xf]
  %v37 = vld [vmem:[%s1 + $0x18] sm:$0xf]
  %v38 = vld [vmem:[%s1 + $0x1c] sm:$0xf]
  %v39 = vld [vmem:[%s1 + $0x20] sm:$0xf]
  %v40 = vld [vmem:[%s1 + $0x24] sm:$0xf]
  %v41 = vld [vmem:[%s1 + $0x28] sm:$0xf]
  %v42 = vld [vmem:[%s1 + $0x2c] sm:$0xf]
  %v43 = vld [vmem:[%s1 + $0x30] sm:$0xf]
  %v44 = vld [vmem:[%s1 + $0x34] sm:$0xf]
  %v45 = vld [vmem:[%s1 + $0x38] sm:$0xf]
  %v46 = vld [vmem:[%s1 + $0x3c] sm:$0xf]
  %v47 = vld [vmem:[%s2] sm:$0x1]
  %v49 = vlaneseq
  %v50 = vshrl.u32 %v49, 7
  %v51 = vsub.s32 0, %v50
  %v52 = vrot.slane %v47, %v51
  %v70 = vunpack.c.l.b16 %v15
  %v71 = vunpack.c.l.b16 %v16
  %v72 = vunpack.c.l.b16 %v17
  %v73 = vunpack.c.l.b16 %v18
  %v74 = vunpack.c.l.b16 %v19
  %v75 = vunpack.c.l.b16 %v20
  %v76 = vunpack.c.l.b16 %v21
  %v77 = vunpack.c.l.b16 %v22
  %v78 = vunpack.c.l.b16 %v23
  %v79 = vunpack.c.l.b16 %v24
  %v80 = vunpack.c.l.b16 %v25
  %v81 = vunpack.c.l.b16 %v26
  %v82 = vunpack.c.l.b16 %v27
  %v83 = vunpack.c.l.b16 %v28
  %v84 = vunpack.c.l.b16 %v29
  %v85 = vunpack.c.l.b16 %v30
  %v86 = vpack.c.b16 %v71, %v70
  %v87 = vpack.c.b16 %v73, %v72
  %v88 = vpack.c.b16 %v75, %v74
  %v89 = vpack.c.b16 %v77, %v76
  %v90 = vpack.c.b16 %v79, %v78
  %v91 = vpack.c.b16 %v81, %v80
  %v92 = vpack.c.b16 %v83, %v82
  %v93 = vpack.c.b16 %v85, %v84
  %v118 = vunpack.c.l.b16 %v31
  %v119 = vunpack.c.l.b16 %v32
  %v120 = vunpack.c.l.b16 %v33
  %v121 = vunpack.c.l.b16 %v34
  %v122 = vunpack.c.l.b16 %v35
  %v123 = vunpack.c.l.b16 %v36
  %v124 = vunpack.c.l.b16 %v37
  %v125 = vunpack.c.l.b16 %v38
  %v126 = vunpack.c.l.b16 %v39
  %v127 = vunpack.c.l.b16 %v40
  %v128 = vunpack.c.l.b16 %v41
  %v129 = vunpack.c.l.b16 %v42
  %v130 = vunpack.c.l.b16 %v43
  %v131 = vunpack.c.l.b16 %v44
  %v132 = vunpack.c.l.b16 %v45
  %v133 = vunpack.c.l.b16 %v46
  %v134 = vpack.c.b16 %v119, %v118
  %v135 = vpack.c.b16 %v121, %v120
  %v136 = vpack.c.b16 %v123, %v122
  %v137 = vpack.c.b16 %v125, %v124
  %v138 = vpack.c.b16 %v127, %v126
  %v139 = vpack.c.b16 %v129, %v128
  %v140 = vpack.c.b16 %v131, %v130
  %v141 = vpack.c.b16 %v133, %v132
  %150 = vmatprep.subr.bf16.mxu0 0
  %151 = vmatpush1.bf16.msra.mxu0 %v141
  %152 = vmatprep.subr.bf16.mxu0 0
  %153 = vmatpush1.bf16.msra.mxu0 %v140
  %154 = vmatprep.subr.bf16.mxu0 0
  %155 = vmatpush1.bf16.msra.mxu0 %v139
  %156 = vmatprep.subr.bf16.mxu0 0
  %157 = vmatpush1.bf16.msra.mxu0 %v138
  %158 = vmatprep.subr.bf16.mxu0 0
  %159 = vmatpush1.bf16.msra.mxu0 %v137
  %160 = vmatprep.subr.bf16.mxu0 0
  %161 = vmatpush1.bf16.msra.mxu0 %v136
  %162 = vmatprep.subr.bf16.mxu0 0
  %163 = vmatpush1.bf16.msra.mxu0 %v135
  %164 = vmatprep.subr.bf16.mxu0 0
  %165 = vmatpush1.bf16.msra.mxu0 %v134
  %166 = vmatprep.subr.bf16.mxu0 0
  %167 = vmatpush2.bf16.msra.mxu0 0
  %168 = vmatprep.subr.bf16.mxu0 0
  %169 = vmatpush2.bf16.msra.mxu0 0
  %170 = vmatprep.subr.bf16.mxu0 0
  %171 = vmatpush2.bf16.msra.mxu0 0
  %172 = vmatprep.subr.bf16.mxu0 0
  %173 = vmatpush2.bf16.msra.mxu0 0
  %174 = vmatprep.subr.bf16.mxu0 0
  %175 = vmatpush2.bf16.msra.mxu0 0
  %176 = vmatprep.subr.bf16.mxu0 0
  %177 = vmatpush2.bf16.msra.mxu0 0
  %178 = vmatprep.subr.bf16.mxu0 0
  %179 = vmatpush2.bf16.msra.mxu0 0
  %180 = vmatprep.subr.bf16.mxu0 0
  %181 = vmatpush2.bf16.msra.mxu0 0
  %182 = vmatprep.mubr.bf16.mxu0 0
  %183 = vmatmul.mubr.bf16.gmra.mxu0 %v86
  %v184 = vpop.f32.mrf.mxu0
  %v185 = vadd.f32 %v52, %v184
  %v186 = vpop.f32.mrf.mxu0
  %v187 = vpop.f32.mrf.mxu0
  %v188 = vadd.f32 %v52, %v187
  %v189 = vpop.f32.mrf.mxu0
  %190 = vmatprep.mubr.bf16.mxu0 0
  %191 = vmatmul.mubr.bf16.gmra.mxu0 %v87
  %v192 = vpop.f32.mrf.mxu0
  %v193 = vadd.f32 %v52, %v192
  %v194 = vpop.f32.mrf.mxu0
  %v195 = vpop.f32.mrf.mxu0
  %v196 = vadd.f32 %v52, %v195
  %v197 = vpop.f32.mrf.mxu0
  %198 = vmatprep.mubr.bf16.mxu0 0
  %199 = vmatmul.mubr.bf16.gmra.mxu0 %v88
  %v200 = vpop.f32.mrf.mxu0
  %v201 = vadd.f32 %v52, %v200
  %v202 = vpop.f32.mrf.mxu0
  %v203 = vpop.f32.mrf.mxu0
  %v204 = vadd.f32 %v52, %v203
  %v205 = vpop.f32.mrf.mxu0
  %206 = vmatprep.mubr.bf16.mxu0 0
  %207 = vmatmul.mubr.bf16.gmra.mxu0 %v89
  %v208 = vpop.f32.mrf.mxu0
  %v209 = vadd.f32 %v52, %v208
  %v210 = vpop.f32.mrf.mxu0
  %v211 = vpop.f32.mrf.mxu0
  %v212 = vadd.f32 %v52, %v211
  %v213 = vpop.f32.mrf.mxu0
  %214 = vmatprep.mubr.bf16.mxu0 0
  %215 = vmatmul.mubr.bf16.gmra.mxu0 %v90
  %v216 = vpop.f32.mrf.mxu0
  %v217 = vadd.f32 %v52, %v216
  %v218 = vpop.f32.mrf.mxu0
  %v219 = vpop.f32.mrf.mxu0
  %v220 = vadd.f32 %v52, %v219
  %v221 = vpop.f32.mrf.mxu0
  %222 = vmatprep.mubr.bf16.mxu0 0
  %223 = vmatmul.mubr.bf16.gmra.mxu0 %v91
  %v224 = vpop.f32.mrf.mxu0
  %v225 = vadd.f32 %v52, %v224
  %v226 = vpop.f32.mrf.mxu0
  %v227 = vpop.f32.mrf.mxu0
  %v228 = vadd.f32 %v52, %v227
  %v229 = vpop.f32.mrf.mxu0
  %230 = vmatprep.mubr.bf16.mxu0 0
  %231 = vmatmul.mubr.bf16.gmra.mxu0 %v92
  %v232 = vpop.f32.mrf.mxu0
  %v233 = vadd.f32 %v52, %v232
  %v234 = vpop.f32.mrf.mxu0
  %v235 = vpop.f32.mrf.mxu0
  %v236 = vadd.f32 %v52, %v235
  %v237 = vpop.f32.mrf.mxu0
  %238 = vmatprep.mubr.bf16.mxu0 0
  %239 = vmatmul.mubr.bf16.gmra.mxu0 %v93
  %v240 = vpop.f32.mrf.mxu0
  %v241 = vadd.f32 %v52, %v240
  %v242 = vpop.f32.mrf.mxu0
  %v243 = vpop.f32.mrf.mxu0
  %v244 = vadd.f32 %v52, %v243
  %v245 = vpop.f32.mrf.mxu0
  %246 = vdwg.mxu0
  %vm247 = vcmp.gt.f32.partialorder %v185, 0.0
  %vm248 = vcmp.gt.f32.partialorder %v188, 0.0
  %vm249 = vcmp.gt.f32.partialorder %v193, 0.0
  %vm250 = vcmp.gt.f32.partialorder %v196, 0.0
  %vm251 = vcmp.gt.f32.partialorder %v201, 0.0
  %vm252 = vcmp.gt.f32.partialorder %v204, 0.0
  %vm253 = vcmp.gt.f32.partialorder %v209, 0.0
  %vm254 = vcmp.gt.f32.partialorder %v212, 0.0
  %vm255 = vcmp.gt.f32.partialorder %v217, 0.0
  %vm256 = vcmp.gt.f32.partialorder %v220, 0.0
  %vm257 = vcmp.gt.f32.partialorder %v225, 0.0
  %vm258 = vcmp.gt.f32.partialorder %v228, 0.0
  %vm259 = vcmp.gt.f32.partialorder %v233, 0.0
  %vm260 = vcmp.gt.f32.partialorder %v236, 0.0
  %vm261 = vcmp.gt.f32.partialorder %v241, 0.0
  %vm262 = vcmp.gt.f32.partialorder %v244, 0.0
  %v263 = vmul.f32 %v185, 0.2
  %v264 = vmul.f32 %v188, 0.2
  %v265 = vmul.f32 %v193, 0.2
  %v266 = vmul.f32 %v196, 0.2
  %v267 = vmul.f32 %v201, 0.2
  %v268 = vmul.f32 %v204, 0.2
  %v269 = vmul.f32 %v209, 0.2
  %v270 = vmul.f32 %v212, 0.2
  %v271 = vmul.f32 %v217, 0.2
  %v272 = vmul.f32 %v220, 0.2
  %v273 = vmul.f32 %v225, 0.2
  %v274 = vmul.f32 %v228, 0.2
  %v275 = vmul.f32 %v233, 0.2
  %v276 = vmul.f32 %v236, 0.2
  %v277 = vmul.f32 %v241, 0.2
  %v278 = vmul.f32 %v244, 0.2
  %v279 = vsel %vm247, %v185, %v263
  %v280 = vsel %vm248, %v188, %v264
  %v281 = vsel %vm249, %v193, %v265
  %v282 = vsel %vm250, %v196, %v266
  %v283 = vsel %vm251, %v201, %v267
  %v284 = vsel %vm252, %v204, %v268
  %v285 = vsel %vm253, %v209, %v269
  %v286 = vsel %vm254, %v212, %v270
  %v287 = vsel %vm255, %v217, %v271
  %v288 = vsel %vm256, %v220, %v272
  %v289 = vsel %vm257, %v225, %v273
  %v290 = vsel %vm258, %v228, %v274
  %v291 = vsel %vm259, %v233, %v275
  %v292 = vsel %vm260, %v236, %v276
  %v293 = vsel %vm261, %v241, %v277
  %v294 = vsel %vm262, %v244, %v278
  %295 = vst [vmem:[%s3] sm:$0xff] %v279
  %296 = vst [vmem:[%s3 + $0x8] sm:$0xff] %v280
  %297 = vst [vmem:[%s3 + $0x10] sm:$0xff] %v281
  %298 = vst [vmem:[%s3 + $0x18] sm:$0xff] %v282
  %299 = vst [vmem:[%s3 + $0x20] sm:$0xff] %v283
  %300 = vst [vmem:[%s3 + $0x28] sm:$0xff] %v284
  %301 = vst [vmem:[%s3 + $0x30] sm:$0xff] %v285
  %302 = vst [vmem:[%s3 + $0x38] sm:$0xff] %v286
  %303 = vst [vmem:[%s3 + $0x40] sm:$0xff] %v287
  %304 = vst [vmem:[%s3 + $0x48] sm:$0xff] %v288
  %305 = vst [vmem:[%s3 + $0x50] sm:$0xff] %v289
  %306 = vst [vmem:[%s3 + $0x58] sm:$0xff] %v290
  %307 = vst [vmem:[%s3 + $0x60] sm:$0xff] %v291
  %308 = vst [vmem:[%s3 + $0x68] sm:$0xff] %v292
  %309 = vst [vmem:[%s3 + $0x70] sm:$0xff] %v293
  %310 = vst [vmem:[%s3 + $0x78] sm:$0xff] %v294
  // Predicated region
  $region14: #{_lambda_.6} parent=0 // pred_check
    _
  $region15: #{_lambda_.6} parent=0 // pred_check_branch
    %312 = sbr.rel (0) target = $region17
  $region16: #{_lambda_.6} parent=0 // pred_region
    _
  $region17: #{_lambda_.6} parent=0 // pred_fallthru
    _
  // Predicated region
  $region18: #{_lambda_.6} parent=0 // pred_check
    _
  $region19: #{_lambda_.6} parent=0 // pred_check_branch
    %314 = sbr.rel (0) target = $region21
  $region20: #{_lambda_.6} parent=0 // pred_region
    _
  $region21: #{_lambda_.6} parent=0 // pred_fallthru
    _

// kernel: squeeze.0
$region0: #{squeeze.0}
  #allocation0 [shape = 's32[1]{0}', space=sflag, size = 0x4, scoped, tag = 'scoped memory for squeeze.0']
  %s0 = inlined_call_operand.vmem [shape: f32[1,128], index: 0, kind: input, shape index: {}]
  %s1 = inlined_call_operand.vmem [shape: f32[1,128], index: 1, kind: input, shape index: {}]
  %s2 = inlined_call_operand.vmem [shape: f32[1,128], index: 2, kind: output, shape index: {}]
  %v3 = vld [vmem:[%s0] sm:$0x1]
  %v4 = vld [vmem:[%s1] sm:$0x1]
  %5 = xla_tuple %v3, %v4
  %6 = xla_tuple %5
  %v7 = vmul.f32 %v3, %v4
  %8 = xla_tuple %v7
  %9 = vst [vmem:[%s2] sm:$0x1] %v7

// kernel: _lambda_.7
$region0: #{_lambda_.7}
  #allocation0 [shape = 'u32[]', space=smem, size = 0x4, offset = 0x4, fixed_abs, tag = 'smem constant byte address 0x4 - core index']
  #allocation1 [shape = 'u32[144,128]{1,0:T(1,128)}', space=vmem, size = 0x12000, scoped, tag = 'internal scratch']
  %s0 = inlined_call_operand.vmem [shape: bf16[32,128], index: 0, kind: input, shape index: {}]
  %s1 = inlined_call_operand.vmem [shape: bf16[128,128], index: 1, kind: input, shape index: {}]
  %s2 = inlined_call_operand.vmem [shape: f32[32,128], index: 2, kind: output, shape index: {0}]
  %s3 = inlined_call_operand.vmem [shape: f32[1,8,128], index: 3, kind: output, shape index: {1}]
  %4 = xla_tuple %s2, %s3
  %s5 = sld [smem:[#allocation0]]
  $region26: #{_lambda_.7} parent=0
    _
  %s7 = ssub.s32 1, %s5
  %s8 = scalar_select 0, %s7, %s5
  // Predicated region
  $region2: #{_lambda_.7} parent=0 // pred_check
    _
  $region3: #{_lambda_.7} parent=0 // pred_check_branch
    %10 = sbr.rel (0) target = $region5
  $region4: #{_lambda_.7} parent=0 // pred_region
    _
  $region5: #{_lambda_.7} parent=0 // pred_fallthru
    _
  // Predicated region
  $region6: #{_lambda_.7} parent=0 // pred_check
    _
  $region7: #{_lambda_.7} parent=0 // pred_check_branch
    %12 = sbr.rel (0) target = $region9
  $region8: #{_lambda_.7} parent=0 // pred_region
    _
  $region9: #{_lambda_.7} parent=0 // pred_fallthru
    _
  %v14 = vld [vmem:[%s0] sm:$0xf]
  %v15 = vld [vmem:[%s0 + $0x4] sm:$0xf]
  %v16 = vld [vmem:[%s0 + $0x8] sm:$0xf]
  %v17 = vld [vmem:[%s0 + $0xc] sm:$0xf]
  %v18 = vld [vmem:[%s1] sm:$0xf]
  %v19 = vld [vmem:[%s1 + $0x4] sm:$0xf]
  %v20 = vld [vmem:[%s1 + $0x8] sm:$0xf]
  %v21 = vld [vmem:[%s1 + $0xc] sm:$0xf]
  %v22 = vld [vmem:[%s1 + $0x10] sm:$0xf]
  %v23 = vld [vmem:[%s1 + $0x14] sm:$0xf]
  %v24 = vld [vmem:[%s1 + $0x18] sm:$0xf]
  %v25 = vld [vmem:[%s1 + $0x1c] sm:$0xf]
  %v26 = vld [vmem:[%s1 + $0x20] sm:$0xf]
  %v27 = vld [vmem:[%s1 + $0x24] sm:$0xf]
  %v28 = vld [vmem:[%s1 + $0x28] sm:$0xf]
  %v29 = vld [vmem:[%s1 + $0x2c] sm:$0xf]
  %v30 = vld [vmem:[%s1 + $0x30] sm:$0xf]
  %v31 = vld [vmem:[%s1 + $0x34] sm:$0xf]
  %v32 = vld [vmem:[%s1 + $0x38] sm:$0xf]
  %v33 = vld [vmem:[%s1 + $0x3c] sm:$0xf]
  %v38 = vunpack.c.l.b16 %v14
  %v39 = vunpack.c.l.b16 %v15
  %v40 = vunpack.c.l.b16 %v16
  %v41 = vunpack.c.l.b16 %v17
  %v42 = vpack.c.b16 %v39, %v38
  %v43 = vpack.c.b16 %v41, %v40
  %v62 = vunpack.c.l.b16 %v18
  %v63 = vunpack.c.l.b16 %v19
  %v64 = vunpack.c.l.b16 %v20
  %v65 = vunpack.c.l.b16 %v21
  %v66 = vunpack.c.l.b16 %v22
  %v67 = vunpack.c.l.b16 %v23
  %v68 = vunpack.c.l.b16 %v24
  %v69 = vunpack.c.l.b16 %v25
  %v70 = vunpack.c.l.b16 %v26
  %v71 = vunpack.c.l.b16 %v27
  %v72 = vunpack.c.l.b16 %v28
  %v73 = vunpack.c.l.b16 %v29
  %v74 = vunpack.c.l.b16 %v30
  %v75 = vunpack.c.l.b16 %v31
  %v76 = vunpack.c.l.b16 %v32
  %v77 = vunpack.c.l.b16 %v33
  %v78 = vpack.c.b16 %v63, %v62
  %v79 = vpack.c.b16 %v65, %v64
  %v80 = vpack.c.b16 %v67, %v66
  %v81 = vpack.c.b16 %v69, %v68
  %v82 = vpack.c.b16 %v71, %v70
  %v83 = vpack.c.b16 %v73, %v72
  %v84 = vpack.c.b16 %v75, %v74
  %v85 = vpack.c.b16 %v77, %v76
  %94 = vmatprep.subr.bf16.mxu0 0
  %95 = vmatpush1.bf16.msra.mxu0 %v85
  %96 = vmatprep.subr.bf16.mxu0 0
  %97 = vmatpush1.bf16.msra.mxu0 %v84
  %98 = vmatprep.subr.bf16.mxu0 0
  %99 = vmatpush1.bf16.msra.mxu0 %v83
  %100 = vmatprep.subr.bf16.mxu0 0
  %101 = vmatpush1.bf16.msra.mxu0 %v82
  %102 = vmatprep.subr.bf16.mxu0 0
  %103 = vmatpush1.bf16.msra.mxu0 %v81
  %104 = vmatprep.subr.bf16.mxu0 0
  %105 = vmatpush1.bf16.msra.mxu0 %v80
  %106 = vmatprep.subr.bf16.mxu0 0
  %107 = vmatpush1.bf16.msra.mxu0 %v79
  %108 = vmatprep.subr.bf16.mxu0 0
  %109 = vmatpush1.bf16.msra.mxu0 %v78
  %110 = vmatprep.subr.bf16.mxu0 0
  %111 = vmatpush2.bf16.msra.mxu0 0
  %112 = vmatprep.subr.bf16.mxu0 0
  %113 = vmatpush2.bf16.msra.mxu0 0
  %114 = vmatprep.subr.bf16.mxu0 0
  %115 = vmatpush2.bf16.msra.mxu0 0
  %116 = vmatprep.subr.bf16.mxu0 0
  %117 = vmatpush2.bf16.msra.mxu0 0
  %118 = vmatprep.subr.bf16.mxu0 0
  %119 = vmatpush2.bf16.msra.mxu0 0
  %120 = vmatprep.subr.bf16.mxu0 0
  %121 = vmatpush2.bf16.msra.mxu0 0
  %122 = vmatprep.subr.bf16.mxu0 0
  %123 = vmatpush2.bf16.msra.mxu0 0
  %124 = vmatprep.subr.bf16.mxu0 0
  %125 = vmatpush2.bf16.msra.mxu0 0
  %126 = vmatprep.mubr.bf16.mxu0 0
  %127 = vmatmul.mubr.bf16.gmra.mxu0 %v42
  %v128 = vpop.f32.mrf.mxu0
  %v129 = vadd.f32 0.0, %v128
  %v130 = vpop.f32.mrf.mxu0
  %v131 = vpop.f32.mrf.mxu0
  %v132 = vadd.f32 0.0, %v131
  %v133 = vpop.f32.mrf.mxu0
  %134 = vmatprep.mubr.bf16.mxu0 0
  %135 = vmatmul.mubr.bf16.gmra.mxu0 %v43
  %v136 = vpop.f32.mrf.mxu0
  %v137 = vadd.f32 0.0, %v136
  %v138 = vpop.f32.mrf.mxu0
  %v139 = vpop.f32.mrf.mxu0
  %v140 = vadd.f32 0.0, %v139
  %v141 = vpop.f32.mrf.mxu0
  %142 = vdwg.mxu0
  %143 = vst [vmem:[%s2] sm:$0xff] %v129
  %144 = vst [vmem:[%s2 + $0x8] sm:$0xff] %v132
  %145 = vst [vmem:[%s2 + $0x10] sm:$0xff] %v137
  %146 = vst [vmem:[%s2 + $0x18] sm:$0xff] %v140
  %v147 = vadd.f32 %v129, %v132
  %v148 = vadd.f32 %v147, %v137
  %v149 = vadd.f32 %v148, %v140
  %v150 = vrot.slane %v149, 4
  %v151 = vadd.f32 %v149, %v150
  %v152 = vrot.slane %v151, 2
  %v153 = vadd.f32 %v151, %v152
  %v154 = vrot.slane %v153, 1
  %v155 = vadd.f32 %v153, %v154
  %v156 = vmul.f32 %v129, %v129
  %v157 = vmul.f32 %v132, %v132
  %v158 = vmul.f32 %v137, %v137
  %v159 = vmul.f32 %v140, %v140
  %v160 = vadd.f32 %v156, %v157
  %v161 = vadd.f32 %v160, %v158
  %v162 = vadd.f32 %v161, %v159
  %v163 = vrot.slane %v162, 4
  %v164 = vadd.f32 %v162, %v163
  %v165 = vrot.slane %v164, 2
  %v166 = vadd.f32 %v164, %v165
  %v167 = vrot.slane %v166, 1
  %v168 = vadd.f32 %v166, %v167
  %v169 = vlaneseq
  %v170 = vshrl.u32 %v169, 7
  %vm171 = vcmp.eq.s32.totalorder %v170, 0
  %vm172 = vcmp.eq.s32.totalorder %v170, 1
  %v173 = vsel %vm172, %v168, 0.0
  %v174 = vsel %vm171, %v155, %v173
  %175 = vst [vmem:[%s3] sm:$0xff] %v174
  // Predicated region
  $region10: #{_lambda_.7} parent=0 // pred_check
    _
  $region11: #{_lambda_.7} parent=0 // pred_check_branch
    %177 = sbr.rel (0) target = $region13
  $region12: #{_lambda_.7} parent=0 // pred_region
    _
  $region13: #{_lambda_.7} parent=0 // pred_fallthru
    _
  // Predicated region
  $region14: #{_lambda_.7} parent=0 // pred_check
    _
  $region15: #{_lambda_.7} parent=0 // pred_check_branch
    %179 = sbr.rel (0) target = $region17
  $region16: #{_lambda_.7} parent=0 // pred_region
    _
  $region17: #{_lambda_.7} parent=0 // pred_fallthru
    _
  // Predicated region
  $region18: #{_lambda_.7} parent=0 // pred_check
    _
  $region19: #{_lambda_.7} parent=0 // pred_check_branch
    %181 = sbr.rel (0) target = $region21
  $region20: #{_lambda_.7} parent=0 // pred_region
    _
  $region21: #{_lambda_.7} parent=0 // pred_fallthru
    _
  // Predicated region
  $region22: #{_lambda_.7} parent=0 // pred_check
    _
  $region23: #{_lambda_.7} parent=0 // pred_check_branch
    %183 = sbr.rel (0) target = $region25
  $region24: #{_lambda_.7} parent=0 // pred_region
    _
  $region25: #{_lambda_.7} parent=0 // pred_fallthru
    _

// kernel: _lambda_.8
$region0: #{_lambda_.8}
  #allocation0 [shape = 'u32[]', space=smem, size = 0x4, offset = 0x4, fixed_abs, tag = 'smem constant byte address 0x4 - core index']
  #allocation1 [shape = 'u32[144,128]{1,0:T(1,128)}', space=vmem, size = 0x12000, scoped, tag = 'internal scratch']
  %s0 = inlined_call_operand.vmem [shape: f32[32,128], index: 0, kind: input, shape index: {}]
  %s1 = inlined_call_operand.vmem [shape: f32[1,128], index: 1, kind: input, shape index: {}]
  %s2 = inlined_call_operand.vmem [shape: f32[1,128], index: 2, kind: input, shape index: {}]
  %s3 = inlined_call_operand.vmem [shape: f32[32,128], index: 3, kind: output, shape index: {}]
  %s4 = sld [smem:[#allocation0]]
  $region22: #{_lambda_.8} parent=0
    _
  %s6 = ssub.s32 1, %s4
  %s7 = scalar_select 0, %s6, %s4
  // Predicated region
  $region2: #{_lambda_.8} parent=0 // pred_check
    _
  $region3: #{_lambda_.8} parent=0 // pred_check_branch
    %9 = sbr.rel (0) target = $region5
  $region4: #{_lambda_.8} parent=0 // pred_region
    _
  $region5: #{_lambda_.8} parent=0 // pred_fallthru
    _
  // Predicated region
  $region6: #{_lambda_.8} parent=0 // pred_check
    _
  $region7: #{_lambda_.8} parent=0 // pred_check_branch
    %11 = sbr.rel (0) target = $region9
  $region8: #{_lambda_.8} parent=0 // pred_region
    _
  $region9: #{_lambda_.8} parent=0 // pred_fallthru
    _
  // Predicated region
  $region10: #{_lambda_.8} parent=0 // pred_check
    _
  $region11: #{_lambda_.8} parent=0 // pred_check_branch
    %13 = sbr.rel (0) target = $region13
  $region12: #{_lambda_.8} parent=0 // pred_region
    _
  $region13: #{_lambda_.8} parent=0 // pred_fallthru
    _
  %v14 = vld [vmem:[%s0] sm:$0xff]
  %v15 = vld [vmem:[%s0 + $0x8] sm:$0xff]
  %v16 = vld [vmem:[%s0 + $0x10] sm:$0xff]
  %v17 = vld [vmem:[%s0 + $0x18] sm:$0xff]
  %v18 = vld [vmem:[%s1] sm:$0x1]
  %v20 = vlaneseq
  %v21 = vshrl.u32 %v20, 7
  %v22 = vsub.s32 0, %v21
  %v23 = vrot.slane %v18, %v22
  %v25 = vmul.f32 %v14, %v23
  %v26 = vmul.f32 %v15, %v23
  %v27 = vmul.f32 %v16, %v23
  %v28 = vmul.f32 %v17, %v23
  %v29 = vld [vmem:[%s2] sm:$0x1]
  %v31 = vlaneseq
  %v32 = vshrl.u32 %v31, 7
  %v33 = vsub.s32 0, %v32
  %v34 = vrot.slane %v29, %v33
  %v36 = vadd.f32 %v25, %v34
  %v37 = vadd.f32 %v26, %v34
  %v38 = vadd.f32 %v27, %v34
  %v39 = vadd.f32 %v28, %v34
  %vm40 = vcmp.gt.f32.partialorder %v36, 0.0
  %vm41 = vcmp.gt.f32.partialorder %v37, 0.0
  %vm42 = vcmp.gt.f32.partialorder %v38, 0.0
  %vm43 = vcmp.gt.f32.partialorder %v39, 0.0
  %v44 = vmul.f32 %v36, 0.2
  %v45 = vmul.f32 %v37, 0.2
  %v46 = vmul.f32 %v38, 0.2
  %v47 = vmul.f32 %v39, 0.2
  %v48 = vsel %vm40, %v36, %v44
  %v49 = vsel %vm41, %v37, %v45
  %v50 = vsel %vm42, %v38, %v46
  %v51 = vsel %vm43, %v39, %v47
  %52 = vst [vmem:[%s3] sm:$0xff] %v48
  %53 = vst [vmem:[%s3 + $0x8] sm:$0xff] %v49
  %54 = vst [vmem:[%s3 + $0x10] sm:$0xff] %v50
  %55 = vst [vmem:[%s3 + $0x18] sm:$0xff] %v51
  // Predicated region
  $region14: #{_lambda_.8} parent=0 // pred_check
    _
  $region15: #{_lambda_.8} parent=0 // pred_check_branch
    %57 = sbr.rel (0) target = $region17
  $region16: #{_lambda_.8} parent=0 // pred_region
    _
  $region17: #{_lambda_.8} parent=0 // pred_fallthru
    _
  // Predicated region
  $region18: #{_lambda_.8} parent=0 // pred_check
    _
  $region19: #{_lambda_.8} parent=0 // pred_check_branch
    %59 = sbr.rel (0) target = $region21
  $region20: #{_lambda_.8} parent=0 // pred_region
    _
  $region21: #{_lambda_.8} parent=0 // pred_fallthru
    _

// kernel: _lambda_.10
$region0: #{_lambda_.10}
  #allocation0 [shape = 'u32[]', space=smem, size = 0x4, offset = 0x4, fixed_abs, tag = 'smem constant byte address 0x4 - core index']
  #allocation1 [shape = 'u32[144,128]{1,0:T(1,128)}', space=vmem, size = 0x12000, scoped, tag = 'internal scratch']
  %s0 = inlined_call_operand.vmem [shape: f32[16,128], index: 0, kind: input, shape index: {}]
  %s1 = inlined_call_operand.vmem [shape: f32[1,128], index: 1, kind: input, shape index: {}]
  %s2 = inlined_call_operand.vmem [shape: f32[1,128], index: 2, kind: input, shape index: {}]
  %s3 = inlined_call_operand.vmem [shape: f32[16,128], index: 3, kind: output, shape index: {}]
  %s4 = sld [smem:[#allocation0]]
  $region22: #{_lambda_.10} parent=0
    _
  %s6 = ssub.s32 1, %s4
  %s7 = scalar_select 0, %s6, %s4
  // Predicated region
  $region2: #{_lambda_.10} parent=0 // pred_check
    _
  $region3: #{_lambda_.10} parent=0 // pred_check_branch
    %9 = sbr.rel (0) target = $region5
  $region4: #{_lambda_.10} parent=0 // pred_region
    _
  $region5: #{_lambda_.10} parent=0 // pred_fallthru
    _
  // Predicated region
  $region6: #{_lambda_.10} parent=0 // pred_check
    _
  $region7: #{_lambda_.10} parent=0 // pred_check_branch
    %11 = sbr.rel (0) target = $region9
  $region8: #{_lambda_.10} parent=0 // pred_region
    _
  $region9: #{_lambda_.10} parent=0 // pred_fallthru
    _
  // Predicated region
  $region10: #{_lambda_.10} parent=0 // pred_check
    _
  $region11: #{_lambda_.10} parent=0 // pred_check_branch
    %13 = sbr.rel (0) target = $region13
  $region12: #{_lambda_.10} parent=0 // pred_region
    _
  $region13: #{_lambda_.10} parent=0 // pred_fallthru
    _
  %v14 = vld [vmem:[%s0] sm:$0xff]
  %v15 = vld [vmem:[%s0 + $0x8] sm:$0xff]
  %v16 = vld [vmem:[%s1] sm:$0x1]
  %v18 = vlaneseq
  %v19 = vshrl.u32 %v18, 7
  %v20 = vsub.s32 0, %v19
  %v21 = vrot.slane %v16, %v20
  %v23 = vmul.f32 %v14, %v21
  %v24 = vmul.f32 %v15, %v21
  %v25 = vld [vmem:[%s2] sm:$0x1]
  %v27 = vlaneseq
  %v28 = vshrl.u32 %v27, 7
  %v29 = vsub.s32 0, %v28
  %v30 = vrot.slane %v25, %v29
  %v32 = vadd.f32 %v23, %v30
  %v33 = vadd.f32 %v24, %v30
  %vm34 = vcmp.gt.f32.partialorder %v32, 0.0
  %vm35 = vcmp.gt.f32.partialorder %v33, 0.0
  %v36 = vmul.f32 %v32, 0.2
  %v37 = vmul.f32 %v33, 0.2
  %v38 = vsel %vm34, %v32, %v36
  %v39 = vsel %vm35, %v33, %v37
  %40 = vst [vmem:[%s3] sm:$0xff] %v38
  %41 = vst [vmem:[%s3 + $0x8] sm:$0xff] %v39
  // Predicated region
  $region14: #{_lambda_.10} parent=0 // pred_check
    _
  $region15: #{_lambda_.10} parent=0 // pred_check_branch
    %43 = sbr.rel (0) target = $region17
  $region16: #{_lambda_.10} parent=0 // pred_region
    _
  $region17: #{_lambda_.10} parent=0 // pred_fallthru
    _
  // Predicated region
  $region18: #{_lambda_.10} parent=0 // pred_check
    _
  $region19: #{_lambda_.10} parent=0 // pred_check_branch
    %45 = sbr.rel (0) target = $region21
  $region20: #{_lambda_.10} parent=0 // pred_region
    _
  $region21: #{_lambda_.10} parent=0 // pred_fallthru
    _

// kernel: _lambda_.9
$region0: #{_lambda_.9}
  #allocation0 [shape = 'u32[]', space=smem, size = 0x4, offset = 0x4, fixed_abs, tag = 'smem constant byte address 0x4 - core index']
  #allocation1 [shape = 'u32[144,128]{1,0:T(1,128)}', space=vmem, size = 0x12000, scoped, tag = 'internal scratch']
  %s0 = inlined_call_operand.vmem [shape: bf16[16,256], index: 0, kind: input, shape index: {}]
  %s1 = inlined_call_operand.vmem [shape: bf16[256,128], index: 1, kind: input, shape index: {}]
  %s2 = inlined_call_operand.vmem [shape: f32[16,128], index: 2, kind: output, shape index: {0}]
  %s3 = inlined_call_operand.vmem [shape: f32[1,8,128], index: 3, kind: output, shape index: {1}]
  %4 = xla_tuple %s2, %s3
  %s5 = sld [smem:[#allocation0]]
  $region26: #{_lambda_.9} parent=0
    _
  %s7 = ssub.s32 1, %s5
  %s8 = scalar_select 0, %s7, %s5
  // Predicated region
  $region2: #{_lambda_.9} parent=0 // pred_check
    _
  $region3: #{_lambda_.9} parent=0 // pred_check_branch
    %10 = sbr.rel (0) target = $region5
  $region4: #{_lambda_.9} parent=0 // pred_region
    _
  $region5: #{_lambda_.9} parent=0 // pred_fallthru
    _
  // Predicated region
  $region6: #{_lambda_.9} parent=0 // pred_check
    _
  $region7: #{_lambda_.9} parent=0 // pred_check_branch
    %12 = sbr.rel (0) target = $region9
  $region8: #{_lambda_.9} parent=0 // pred_region
    _
  $region9: #{_lambda_.9} parent=0 // pred_fallthru
    _
  %v14 = vld [vmem:[%s0] sm:$0xff]
  %v15 = vld [vmem:[%s0 + $0x8] sm:$0xff]
  %v16 = vld [vmem:[%s1] sm:$0xf]
  %v17 = vld [vmem:[%s1 + $0x4] sm:$0xf]
  %v18 = vld [vmem:[%s1 + $0x8] sm:$0xf]
  %v19 = vld [vmem:[%s1 + $0xc] sm:$0xf]
  %v20 = vld [vmem:[%s1 + $0x10] sm:$0xf]
  %v21 = vld [vmem:[%s1 + $0x14] sm:$0xf]
  %v22 = vld [vmem:[%s1 + $0x18] sm:$0xf]
  %v23 = vld [vmem:[%s1 + $0x1c] sm:$0xf]
  %v24 = vld [vmem:[%s1 + $0x20] sm:$0xf]
  %v25 = vld [vmem:[%s1 + $0x24] sm:$0xf]
  %v26 = vld [vmem:[%s1 + $0x28] sm:$0xf]
  %v27 = vld [vmem:[%s1 + $0x2c] sm:$0xf]
  %v28 = vld [vmem:[%s1 + $0x30] sm:$0xf]
  %v29 = vld [vmem:[%s1 + $0x34] sm:$0xf]
  %v30 = vld [vmem:[%s1 + $0x38] sm:$0xf]
  %v31 = vld [vmem:[%s1 + $0x3c] sm:$0xf]
  %v32 = vld [vmem:[%s1 + $0x40] sm:$0xf]
  %v33 = vld [vmem:[%s1 + $0x44] sm:$0xf]
  %v34 = vld [vmem:[%s1 + $0x48] sm:$0xf]
  %v35 = vld [vmem:[%s1 + $0x4c] sm:$0xf]
  %v36 = vld [vmem:[%s1 + $0x50] sm:$0xf]
  %v37 = vld [vmem:[%s1 + $0x54] sm:$0xf]
  %v38 = vld [vmem:[%s1 + $0x58] sm:$0xf]
  %v39 = vld [vmem:[%s1 + $0x5c] sm:$0xf]
  %v40 = vld [vmem:[%s1 + $0x60] sm:$0xf]
  %v41 = vld [vmem:[%s1 + $0x64] sm:$0xf]
  %v42 = vld [vmem:[%s1 + $0x68] sm:$0xf]
  %v43 = vld [vmem:[%s1 + $0x6c] sm:$0xf]
  %v44 = vld [vmem:[%s1 + $0x70] sm:$0xf]
  %v45 = vld [vmem:[%s1 + $0x74] sm:$0xf]
  %v46 = vld [vmem:[%s1 + $0x78] sm:$0xf]
  %v47 = vld [vmem:[%s1 + $0x7c] sm:$0xf]
  %v50 = vunpack.c.l.b16 %v14
  %v51 = vunpack.c.h.b16 %v14
  %v52 = vunpack.c.l.b16 %v15
  %v53 = vunpack.c.h.b16 %v15
  %v54 = vpack.c.b16 %v52, %v50
  %v55 = vpack.c.b16 %v53, %v51
  %v90 = vunpack.c.l.b16 %v16
  %v91 = vunpack.c.l.b16 %v17
  %v92 = vunpack.c.l.b16 %v18
  %v93 = vunpack.c.l.b16 %v19
  %v94 = vunpack.c.l.b16 %v20
  %v95 = vunpack.c.l.b16 %v21
  %v96 = vunpack.c.l.b16 %v22
  %v97 = vunpack.c.l.b16 %v23
  %v98 = vunpack.c.l.b16 %v24
  %v99 = vunpack.c.l.b16 %v25
  %v100 = vunpack.c.l.b16 %v26
  %v101 = vunpack.c.l.b16 %v27
  %v102 = vunpack.c.l.b16 %v28
  %v103 = vunpack.c.l.b16 %v29
  %v104 = vunpack.c.l.b16 %v30
  %v105 = vunpack.c.l.b16 %v31
  %v106 = vunpack.c.l.b16 %v32
  %v107 = vunpack.c.l.b16 %v33
  %v108 = vunpack.c.l.b16 %v34
  %v109 = vunpack.c.l.b16 %v35
  %v110 = vunpack.c.l.b16 %v36
  %v111 = vunpack.c.l.b16 %v37
  %v112 = vunpack.c.l.b16 %v38
  %v113 = vunpack.c.l.b16 %v39
  %v114 = vunpack.c.l.b16 %v40
  %v115 = vunpack.c.l.b16 %v41
  %v116 = vunpack.c.l.b16 %v42
  %v117 = vunpack.c.l.b16 %v43
  %v118 = vunpack.c.l.b16 %v44
  %v119 = vunpack.c.l.b16 %v45
  %v120 = vunpack.c.l.b16 %v46
  %v121 = vunpack.c.l.b16 %v47
  %v122 = vpack.c.b16 %v91, %v90
  %v123 = vpack.c.b16 %v93, %v92
  %v124 = vpack.c.b16 %v95, %v94
  %v125 = vpack.c.b16 %v97, %v96
  %v126 = vpack.c.b16 %v99, %v98
  %v127 = vpack.c.b16 %v101, %v100
  %v128 = vpack.c.b16 %v103, %v102
  %v129 = vpack.c.b16 %v105, %v104
  %v130 = vpack.c.b16 %v107, %v106
  %v131 = vpack.c.b16 %v109, %v108
  %v132 = vpack.c.b16 %v111, %v110
  %v133 = vpack.c.b16 %v113, %v112
  %v134 = vpack.c.b16 %v115, %v114
  %v135 = vpack.c.b16 %v117, %v116
  %v136 = vpack.c.b16 %v119, %v118
  %v137 = vpack.c.b16 %v121, %v120
  %154 = vmatprep.subr.bf16.mxu0 0
  %155 = vmatpush1.bf16.msra.mxu0 %v129
  %156 = vmatprep.subr.bf16.mxu0 0
  %157 = vmatpush1.bf16.msra.mxu0 %v128
  %158 = vmatprep.subr.bf16.mxu0 0
  %159 = vmatpush1.bf16.msra.mxu0 %v127
  %160 = vmatprep.subr.bf16.mxu0 0
  %161 = vmatpush1.bf16.msra.mxu0 %v126
  %162 = vmatprep.subr.bf16.mxu0 0
  %163 = vmatpush1.bf16.msra.mxu0 %v125
  %164 = vmatprep.subr.bf16.mxu0 0
  %165 = vmatpush1.bf16.msra.mxu0 %v124
  %166 = vmatprep.subr.bf16.mxu0 0
  %167 = vmatpush1.bf16.msra.mxu0 %v123
  %168 = vmatprep.subr.bf16.mxu0 0
  %169 = vmatpush1.bf16.msra.mxu0 %v122
  %170 = vmatprep.subr.bf16.mxu0 0
  %171 = vmatpush2.bf16.msra.mxu0 %v137
  %172 = vmatprep.subr.bf16.mxu0 0
  %173 = vmatpush2.bf16.msra.mxu0 %v136
  %174 = vmatprep.subr.bf16.mxu0 0
  %175 = vmatpush2.bf16.msra.mxu0 %v135
  %176 = vmatprep.subr.bf16.mxu0 0
  %177 = vmatpush2.bf16.msra.mxu0 %v134
  %178 = vmatprep.subr.bf16.mxu0 0
  %179 = vmatpush2.bf16.msra.mxu0 %v133
  %180 = vmatprep.subr.bf16.mxu0 0
  %181 = vmatpush2.bf16.msra.mxu0 %v132
  %182 = vmatprep.subr.bf16.mxu0 0
  %183 = vmatpush2.bf16.msra.mxu0 %v131
  %184 = vmatprep.subr.bf16.mxu0 0
  %185 = vmatpush2.bf16.msra.mxu0 %v130
  %186 = vmatprep.mubr.bf16.mxu0 %v55
  %187 = vmatmul.mubr.bf16.gmra.mxu0 %v54
  %v188 = vpop.f32.mrf.mxu0
  %v189 = vadd.f32 0.0, %v188
  %v190 = vpop.f32.mrf.mxu0
  %v191 = vpop.f32.mrf.mxu0
  %v192 = vadd.f32 0.0, %v191
  %v193 = vpop.f32.mrf.mxu0
  %194 = vdwg.mxu0
  %195 = vst [vmem:[%s2] sm:$0xff] %v189
  %196 = vst [vmem:[%s2 + $0x8] sm:$0xff] %v192
  %v197 = vadd.f32 %v189, %v192
  %v198 = vrot.slane %v197, 4
  %v199 = vadd.f32 %v197, %v198
  %v200 = vrot.slane %v199, 2
  %v201 = vadd.f32 %v199, %v200
  %v202 = vrot.slane %v201, 1
  %v203 = vadd.f32 %v201, %v202
  %v204 = vmul.f32 %v189, %v189
  %v205 = vmul.f32 %v192, %v192
  %v206 = vadd.f32 %v204, %v205
  %v207 = vrot.slane %v206, 4
  %v208 = vadd.f32 %v206, %v207
  %v209 = vrot.slane %v208, 2
  %v210 = vadd.f32 %v208, %v209
  %v211 = vrot.slane %v210, 1
  %v212 = vadd.f32 %v210, %v211
  %v213 = vlaneseq
  %v214 = vshrl.u32 %v213, 7
  %vm215 = vcmp.eq.s32.totalorder %v214, 0
  %vm216 = vcmp.eq.s32.totalorder %v214, 1
  %v217 = vsel %vm216, %v212, 0.0
  %v218 = vsel %vm215, %v203, %v217
  %219 = vst [vmem:[%s3] sm:$0xff] %v218
  // Predicated region
  $region10: #{_lambda_.9} parent=0 // pred_check
    _
  $region11: #{_lambda_.9} parent=0 // pred_check_branch
    %221 = sbr.rel (0) target = $region13
  $region12: #{_lambda_.9} parent=0 // pred_region
    _
  $region13: #{_lambda_.9} parent=0 // pred_fallthru
    _
  // Predicated region
  $region14: #{_lambda_.9} parent=0 // pred_check
    _
  $region15: #{_lambda_.9} parent=0 // pred_check_branch
    %223 = sbr.rel (0) target = $region17
  $region16: #{_lambda_.9} parent=0 // pred_region
    _
  $region17: #{_lambda_.9} parent=0 // pred_fallthru
    _
  // Predicated region
  $region18: #{_lambda_.9} parent=0 // pred_check
    _
  $region19: #{_lambda_.9} parent=0 // pred_check_branch
    %225 = sbr.rel (0) target = $region21
  $region20: #{_lambda_.9} parent=0 // pred_region
    _
  $region21: #{_lambda_.9} parent=0 // pred_fallthru
    _
  // Predicated region
  $region22: #{_lambda_.9} parent=0 // pred_check
    _
  $region23: #{_lambda_.9} parent=0 // pred_check_branch
    %227 = sbr.rel (0) target = $region25
  $region24: #{_lambda_.9} parent=0 // pred_region
    _
  $region25: #{_lambda_.9} parent=0 // pred_fallthru
    _

// kernel: _lambda_.11
$region0: #{_lambda_.11}
  #allocation0 [shape = 'u32[]', space=smem, size = 0x4, offset = 0x4, fixed_abs, tag = 'smem constant byte address 0x4 - core index']
  #allocation1 [shape = 'u32[144,128]{1,0:T(1,128)}', space=vmem, size = 0x12000, scoped, tag = 'internal scratch']
  %s0 = inlined_call_operand.vmem [shape: bf16[16,512], index: 0, kind: input, shape index: {}]
  %s1 = inlined_call_operand.vmem [shape: bf16[512,128], index: 1, kind: input, shape index: {}]
  %s2 = inlined_call_operand.vmem [shape: f32[1,128], index: 2, kind: input, shape index: {}]
  %s3 = inlined_call_operand.vmem [shape: f32[16,128], index: 3, kind: output, shape index: {}]
  %s4 = sld [smem:[#allocation0]]
  $region22: #{_lambda_.11} parent=0
    _
  %s6 = ssub.s32 1, %s4
  %s7 = scalar_select 0, %s6, %s4
  // Predicated region
  $region2: #{_lambda_.11} parent=0 // pred_check
    _
  $region3: #{_lambda_.11} parent=0 // pred_check_branch
    %9 = sbr.rel (0) target = $region5
  $region4: #{_lambda_.11} parent=0 // pred_region
    _
  $region5: #{_lambda_.11} parent=0 // pred_fallthru
    _
  // Predicated region
  $region6: #{_lambda_.11} parent=0 // pred_check
    _
  $region7: #{_lambda_.11} parent=0 // pred_check_branch
    %11 = sbr.rel (0) target = $region9
  $region8: #{_lambda_.11} parent=0 // pred_region
    _
  $region9: #{_lambda_.11} parent=0 // pred_fallthru
    _
  // Predicated region
  $region10: #{_lambda_.11} parent=0 // pred_check
    _
  $region11: #{_lambda_.11} parent=0 // pred_check_branch
    %13 = sbr.rel (0) target = $region13
  $region12: #{_lambda_.11} parent=0 // pred_region
    _
  $region13: #{_lambda_.11} parent=0 // pred_fallthru
    _
  %v15 = vld [vmem:[%s0] sm:$0xff]
  %v16 = vld [vmem:[%s0 + $0x8] sm:$0xff]
  %v17 = vld [vmem:[%s0 + $0x10] sm:$0xff]
  %v18 = vld [vmem:[%s0 + $0x18] sm:$0xff]
  %v19 = vld [vmem:[%s1] sm:$0xf]
  %v20 = vld [vmem:[%s1 + $0x4] sm:$0xf]
  %v21 = vld [vmem:[%s1 + $0x8] sm:$0xf]
  %v22 = vld [vmem:[%s1 + $0xc] sm:$0xf]
  %v23 = vld [vmem:[%s1 + $0x10] sm:$0xf]
  %v24 = vld [vmem:[%s1 + $0x14] sm:$0xf]
  %v25 = vld [vmem:[%s1 + $0x18] sm:$0xf]
  %v26 = vld [vmem:[%s1 + $0x1c] sm:$0xf]
  %v27 = vld [vmem:[%s1 + $0x20] sm:$0xf]
  %v28 = vld [vmem:[%s1 + $0x24] sm:$0xf]
  %v29 = vld [vmem:[%s1 + $0x28] sm:$0xf]
  %v30 = vld [vmem:[%s1 + $0x2c] sm:$0xf]
  %v31 = vld [vmem:[%s1 + $0x30] sm:$0xf]
  %v32 = vld [vmem:[%s1 + $0x34] sm:$0xf]
  %v33 = vld [vmem:[%s1 + $0x38] sm:$0xf]
  %v34 = vld [vmem:[%s1 + $0x3c] sm:$0xf]
  %v35 = vld [vmem:[%s1 + $0x40] sm:$0xf]
  %v36 = vld [vmem:[%s1 + $0x44] sm:$0xf]
  %v37 = vld [vmem:[%s1 + $0x48] sm:$0xf]
  %v38 = vld [vmem:[%s1 + $0x4c] sm:$0xf]
  %v39 = vld [vmem:[%s1 + $0x50] sm:$0xf]
  %v40 = vld [vmem:[%s1 + $0x54] sm:$0xf]
  %v41 = vld [vmem:[%s1 + $0x58] sm:$0xf]
  %v42 = vld [vmem:[%s1 + $0x5c] sm:$0xf]
  %v43 = vld [vmem:[%s1 + $0x60] sm:$0xf]
  %v44 = vld [vmem:[%s1 + $0x64] sm:$0xf]
  %v45 = vld [vmem:[%s1 + $0x68] sm:$0xf]
  %v46 = vld [vmem:[%s1 + $0x6c] sm:$0xf]
  %v47 = vld [vmem:[%s1 + $0x70] sm:$0xf]
  %v48 = vld [vmem:[%s1 + $0x74] sm:$0xf]
  %v49 = vld [vmem:[%s1 + $0x78] sm:$0xf]
  %v50 = vld [vmem:[%s1 + $0x7c] sm:$0xf]
  %v51 = vld [vmem:[%s1 + $0x80] sm:$0xf]
  %v52 = vld [vmem:[%s1 + $0x84] sm:$0xf]
  %v53 = vld [vmem:[%s1 + $0x88] sm:$0xf]
  %v54 = vld [vmem:[%s1 + $0x8c] sm:$0xf]
  %v55 = vld [vmem:[%s1 + $0x90] sm:$0xf]
  %v56 = vld [vmem:[%s1 + $0x94] sm:$0xf]
  %v57 = vld [vmem:[%s1 + $0x98] sm:$0xf]
  %v58 = vld [vmem:[%s1 + $0x9c] sm:$0xf]
  %v59 = vld [vmem:[%s1 + $0xa0] sm:$0xf]
  %v60 = vld [vmem:[%s1 + $0xa4] sm:$0xf]
  %v61 = vld [vmem:[%s1 + $0xa8] sm:$0xf]
  %v62 = vld [vmem:[%s1 + $0xac] sm:$0xf]
  %v63 = vld [vmem:[%s1 + $0xb0] sm:$0xf]
  %v64 = vld [vmem:[%s1 + $0xb4] sm:$0xf]
  %v65 = vld [vmem:[%s1 + $0xb8] sm:$0xf]
  %v66 = vld [vmem:[%s1 + $0xbc] sm:$0xf]
  %v67 = vld [vmem:[%s1 + $0xc0] sm:$0xf]
  %v68 = vld [vmem:[%s1 + $0xc4] sm:$0xf]
  %v69 = vld [vmem:[%s1 + $0xc8] sm:$0xf]
  %v70 = vld [vmem:[%s1 + $0xcc] sm:$0xf]
  %v71 = vld [vmem:[%s1 + $0xd0] sm:$0xf]
  %v72 = vld [vmem:[%s1 + $0xd4] sm:$0xf]
  %v73 = vld [vmem:[%s1 + $0xd8] sm:$0xf]
  %v74 = vld [vmem:[%s1 + $0xdc] sm:$0xf]
  %v75 = vld [vmem:[%s1 + $0xe0] sm:$0xf]
  %v76 = vld [vmem:[%s1 + $0xe4] sm:$0xf]
  %v77 = vld [vmem:[%s1 + $0xe8] sm:$0xf]
  %v78 = vld [vmem:[%s1 + $0xec] sm:$0xf]
  %v79 = vld [vmem:[%s1 + $0xf0] sm:$0xf]
  %v80 = vld [vmem:[%s1 + $0xf4] sm:$0xf]
  %v81 = vld [vmem:[%s1 + $0xf8] sm:$0xf]
  %v82 = vld [vmem:[%s1 + $0xfc] sm:$0xf]
  %v83 = vld [vmem:[%s2] sm:$0x1]
  %v85 = vlaneseq
  %v86 = vshrl.u32 %v85, 7
  %v87 = vsub.s32 0, %v86
  %v88 = vrot.slane %v83, %v87
  %v94 = vunpack.c.l.b16 %v15
  %v95 = vunpack.c.h.b16 %v15
  %v96 = vunpack.c.l.b16 %v16
  %v97 = vunpack.c.h.b16 %v16
  %v98 = vunpack.c.l.b16 %v17
  %v99 = vunpack.c.h.b16 %v17
  %v100 = vunpack.c.l.b16 %v18
  %v101 = vunpack.c.h.b16 %v18
  %v102 = vpack.c.b16 %v98, %v94
  %v103 = vpack.c.b16 %v99, %v95
  %v104 = vpack.c.b16 %v100, %v96
  %v105 = vpack.c.b16 %v101, %v97
  %v174 = vunpack.c.l.b16 %v19
  %v175 = vunpack.c.l.b16 %v20
  %v176 = vunpack.c.l.b16 %v21
  %v177 = vunpack.c.l.b16 %v22
  %v178 = vunpack.c.l.b16 %v23
  %v179 = vunpack.c.l.b16 %v24
  %v180 = vunpack.c.l.b16 %v25
  %v181 = vunpack.c.l.b16 %v26
  %v182 = vunpack.c.l.b16 %v27
  %v183 = vunpack.c.l.b16 %v28
  %v184 = vunpack.c.l.b16 %v29
  %v185 = vunpack.c.l.b16 %v30
  %v186 = vunpack.c.l.b16 %v31
  %v187 = vunpack.c.l.b16 %v32
  %v188 = vunpack.c.l.b16 %v33
  %v189 = vunpack.c.l.b16 %v34
  %v190 = vunpack.c.l.b16 %v35
  %v191 = vunpack.c.l.b16 %v36
  %v192 = vunpack.c.l.b16 %v37
  %v193 = vunpack.c.l.b16 %v38
  %v194 = vunpack.c.l.b16 %v39
  %v195 = vunpack.c.l.b16 %v40
  %v196 = vunpack.c.l.b16 %v41
  %v197 = vunpack.c.l.b16 %v42
  %v198 = vunpack.c.l.b16 %v43
  %v199 = vunpack.c.l.b16 %v44
  %v200 = vunpack.c.l.b16 %v45
  %v201 = vunpack.c.l.b16 %v46
  %v202 = vunpack.c.l.b16 %v47
  %v203 = vunpack.c.l.b16 %v48
  %v204 = vunpack.c.l.b16 %v49
  %v205 = vunpack.c.l.b16 %v50
  %v206 = vunpack.c.l.b16 %v51
  %v207 = vunpack.c.l.b16 %v52
  %v208 = vunpack.c.l.b16 %v53
  %v209 = vunpack.c.l.b16 %v54
  %v210 = vunpack.c.l.b16 %v55
  %v211 = vunpack.c.l.b16 %v56
  %v212 = vunpack.c.l.b16 %v57
  %v213 = vunpack.c.l.b16 %v58
  %v214 = vunpack.c.l.b16 %v59
  %v215 = vunpack.c.l.b16 %v60
  %v216 = vunpack.c.l.b16 %v61
  %v217 = vunpack.c.l.b16 %v62
  %v218 = vunpack.c.l.b16 %v63
  %v219 = vunpack.c.l.b16 %v64
  %v220 = vunpack.c.l.b16 %v65
  %v221 = vunpack.c.l.b16 %v66
  %v222 = vunpack.c.l.b16 %v67
  %v223 = vunpack.c.l.b16 %v68
  %v224 = vunpack.c.l.b16 %v69
  %v225 = vunpack.c.l.b16 %v70
  %v226 = vunpack.c.l.b16 %v71
  %v227 = vunpack.c.l.b16 %v72
  %v228 = vunpack.c.l.b16 %v73
  %v229 = vunpack.c.l.b16 %v74
  %v230 = vunpack.c.l.b16 %v75
  %v231 = vunpack.c.l.b16 %v76
  %v232 = vunpack.c.l.b16 %v77
  %v233 = vunpack.c.l.b16 %v78
  %v234 = vunpack.c.l.b16 %v79
  %v235 = vunpack.c.l.b16 %v80
  %v236 = vunpack.c.l.b16 %v81
  %v237 = vunpack.c.l.b16 %v82
  %v238 = vpack.c.b16 %v175, %v174
  %v239 = vpack.c.b16 %v177, %v176
  %v240 = vpack.c.b16 %v179, %v178
  %v241 = vpack.c.b16 %v181, %v180
  %v242 = vpack.c.b16 %v183, %v182
  %v243 = vpack.c.b16 %v185, %v184
  %v244 = vpack.c.b16 %v187, %v186
  %v245 = vpack.c.b16 %v189, %v188
  %v246 = vpack.c.b16 %v191, %v190
  %v247 = vpack.c.b16 %v193, %v192
  %v248 = vpack.c.b16 %v195, %v194
  %v249 = vpack.c.b16 %v197, %v196
  %v250 = vpack.c.b16 %v199, %v198
  %v251 = vpack.c.b16 %v201, %v200
  %v252 = vpack.c.b16 %v203, %v202
  %v253 = vpack.c.b16 %v205, %v204
  %v254 = vpack.c.b16 %v207, %v206
  %v255 = vpack.c.b16 %v209, %v208
  %v256 = vpack.c.b16 %v211, %v210
  %v257 = vpack.c.b16 %v213, %v212
  %v258 = vpack.c.b16 %v215, %v214
  %v259 = vpack.c.b16 %v217, %v216
  %v260 = vpack.c.b16 %v219, %v218
  %v261 = vpack.c.b16 %v221, %v220
  %v262 = vpack.c.b16 %v223, %v222
  %v263 = vpack.c.b16 %v225, %v224
  %v264 = vpack.c.b16 %v227, %v226
  %v265 = vpack.c.b16 %v229, %v228
  %v266 = vpack.c.b16 %v231, %v230
  %v267 = vpack.c.b16 %v233, %v232
  %v268 = vpack.c.b16 %v235, %v234
  %v269 = vpack.c.b16 %v237, %v236
  %302 = vmatprep.subr.bf16.mxu0 0
  %303 = vmatpush1.bf16.msra.mxu0 %v245
  %304 = vmatprep.subr.bf16.mxu0 0
  %305 = vmatpush1.bf16.msra.mxu0 %v244
  %306 = vmatprep.subr.bf16.mxu0 0
  %307 = vmatpush1.bf16.msra.mxu0 %v243
  %308 = vmatprep.subr.bf16.mxu0 0
  %309 = vmatpush1.bf16.msra.mxu0 %v242
  %310 = vmatprep.subr.bf16.mxu0 0
  %311 = vmatpush1.bf16.msra.mxu0 %v241
  %312 = vmatprep.subr.bf16.mxu0 0
  %313 = vmatpush1.bf16.msra.mxu0 %v240
  %314 = vmatprep.subr.bf16.mxu0 0
  %315 = vmatpush1.bf16.msra.mxu0 %v239
  %316 = vmatprep.subr.bf16.mxu0 0
  %317 = vmatpush1.bf16.msra.mxu0 %v238
  %318 = vmatprep.subr.bf16.mxu0 0
  %319 = vmatpush2.bf16.msra.mxu0 %v253
  %320 = vmatprep.subr.bf16.mxu0 0
  %321 = vmatpush2.bf16.msra.mxu0 %v252
  %322 = vmatprep.subr.bf16.mxu0 0
  %323 = vmatpush2.bf16.msra.mxu0 %v251
  %324 = vmatprep.subr.bf16.mxu0 0
  %325 = vmatpush2.bf16.msra.mxu0 %v250
  %326 = vmatprep.subr.bf16.mxu0 0
  %327 = vmatpush2.bf16.msra.mxu0 %v249
  %328 = vmatprep.subr.bf16.mxu0 0
  %329 = vmatpush2.bf16.msra.mxu0 %v248
  %330 = vmatprep.subr.bf16.mxu0 0
  %331 = vmatpush2.bf16.msra.mxu0 %v247
  %332 = vmatprep.subr.bf16.mxu0 0
  %333 = vmatpush2.bf16.msra.mxu0 %v246
  %334 = vmatprep.mubr.bf16.mxu0 %v103
  %335 = vmatmul.mubr.bf16.gmra.mxu0 %v102
  %v336 = vpop.f32.mrf.mxu0
  %v337 = vadd.f32 %v88, %v336
  %v338 = vpop.f32.mrf.mxu0
  %v339 = vpop.f32.mrf.mxu0
  %v340 = vadd.f32 %v88, %v339
  %v341 = vpop.f32.mrf.mxu0
  %342 = vdwg.mxu0
  %343 = vmatprep.subr.bf16.mxu0 0
  %344 = vmatpush1.bf16.msra.mxu0 %v261
  %345 = vmatprep.subr.bf16.mxu0 0
  %346 = vmatpush1.bf16.msra.mxu0 %v260
  %347 = vmatprep.subr.bf16.mxu0 0
  %348 = vmatpush1.bf16.msra.mxu0 %v259
  %349 = vmatprep.subr.bf16.mxu0 0
  %350 = vmatpush1.bf16.msra.mxu0 %v258
  %351 = vmatprep.subr.bf16.mxu0 0
  %352 = vmatpush1.bf16.msra.mxu0 %v257
  %353 = vmatprep.subr.bf16.mxu0 0
  %354 = vmatpush1.bf16.msra.mxu0 %v256
  %355 = vmatprep.subr.bf16.mxu0 0
  %356 = vmatpush1.bf16.msra.mxu0 %v255
  %357 = vmatprep.subr.bf16.mxu0 0
  %358 = vmatpush1.bf16.msra.mxu0 %v254
  %359 = vmatprep.subr.bf16.mxu0 0
  %360 = vmatpush2.bf16.msra.mxu0 %v269
  %361 = vmatprep.subr.bf16.mxu0 0
  %362 = vmatpush2.bf16.msra.mxu0 %v268
  %363 = vmatprep.subr.bf16.mxu0 0
  %364 = vmatpush2.bf16.msra.mxu0 %v267
  %365 = vmatprep.subr.bf16.mxu0 0
  %366 = vmatpush2.bf16.msra.mxu0 %v266
  %367 = vmatprep.subr.bf16.mxu0 0
  %368 = vmatpush2.bf16.msra.mxu0 %v265
  %369 = vmatprep.subr.bf16.mxu0 0
  %370 = vmatpush2.bf16.msra.mxu0 %v264
  %371 = vmatprep.subr.bf16.mxu0 0
  %372 = vmatpush2.bf16.msra.mxu0 %v263
  %373 = vmatprep.subr.bf16.mxu0 0
  %374 = vmatpush2.bf16.msra.mxu0 %v262
  %375 = vmatprep.mubr.bf16.mxu0 %v105
  %376 = vmatmul.mubr.bf16.gmra.mxu0 %v104
  %v377 = vpop.f32.mrf.mxu0
  %v378 = vadd.f32 %v337, %v377
  %v379 = vpop.f32.mrf.mxu0
  %v380 = vpop.f32.mrf.mxu0
  %v381 = vadd.f32 %v340, %v380
  %v382 = vpop.f32.mrf.mxu0
  %383 = vdwg.mxu0
  %v384 = vand.u32 2147483647, %v378
  %v385 = vand.u32 2147483647, %v381
  %v386 = vsub.f32 0.0, %v384
  %v387 = vsub.f32 0.0, %v385
  %v388 = vmul.f32 %v386, 1.442695
  %v389 = vpow.pop %v388
  %v390 = vmul.f32 %v387, 1.442695
  %v391 = vpow.pop %v390
  %vm392 = vcmp.ge.f32.partialorder %v378, 0.0
  %vm393 = vcmp.ge.f32.partialorder %v381, 0.0
  %v394 = vsel %vm392, 1.0, %v389
  %v395 = vsel %vm393, 1.0, %v391
  %v396 = vadd.f32 %v389, 1.0
  %v397 = vadd.f32 %v391, 1.0
  %v398 = vrcp.pop %v396
  %v399 = vmul.f32 %v394, %v398
  %v400 = vrcp.pop %v397
  %v401 = vmul.f32 %v395, %v400
  %402 = vst [vmem:[%s3] sm:$0xff] %v399
  %403 = vst [vmem:[%s3 + $0x8] sm:$0xff] %v401
  // Predicated region
  $region14: #{_lambda_.11} parent=0 // pred_check
    _
  $region15: #{_lambda_.11} parent=0 // pred_check_branch
    %405 = sbr.rel (0) target = $region17
  $region16: #{_lambda_.11} parent=0 // pred_region
    _
  $region17: #{_lambda_.11} parent=0 // pred_fallthru
    _
  // Predicated region
  $region18: #{_lambda_.11} parent=0 // pred_check
    _
  $region19: #{_lambda_.11} parent=0 // pred_check_branch
    %407 = sbr.rel (0) target = $region21
  $region20: #{_lambda_.11} parent=0 // pred_region
    _
  $region21: #{_lambda_.11} parent=0 // pred_fallthru
    _

</llo_original>
